<compile_context>
chip_gen: v5e
topology: v5e:2x2
jax: 0.10.0
libtpu: 0.0.40
codegen_flags: <defaults>
</compile_context>

<pallas_src>
import functools
import math

import jax
import jax.numpy as jnp
from jax.experimental import pallas as pl
from jax.experimental.pallas import tpu as pltpu

EPS = 1e-5
_TARGET_BLOCK_BYTES = 1 << 20          # ~1 MiB per pipelined block


def _pick_block_rows(n_rows, width, itemsize):
    rows = _TARGET_BLOCK_BYTES // max(1, width * itemsize)
    rows = max(8, (int(rows) // 8) * 8)        # keep sublane-aligned
    rows = min(rows, 4096)
    if rows >= n_rows:
        return n_rows                          # full extent (always a legal block dim)
    return rows


def _vmem_limit(block_rows, width, itemsize):
    io_blk = block_rows * width * itemsize     # one input- or output-side buffer
    f32_blk = block_rows * width * 4           # f32 intermediates
    est = 4 * io_blk + 6 * f32_blk + (2 << 20)
    return int(min(64 << 20, max(32 << 20, est)))


def _bfln_rows_kernel(x_ref, w_ref, o_ref):
    # Fallback path: x_ref (R, C) with C the full normalized dim, w_ref (1, C).
    x = x_ref[...].astype(jnp.float32)
    w = w_ref[...].astype(jnp.float32)
    mu = jnp.mean(x, axis=-1, keepdims=True)
    ms = jnp.mean(x * x, axis=-1, keepdims=True)
    var = jnp.maximum(ms - mu * mu, 0.0)                 # biased variance (unbiased=False)
    o_ref[...] = (x * jax.lax.rsqrt(var + EPS) * w).astype(o_ref.dtype)


def _bfln_packed_kernel(x_ref, w_ref, s_ref, st_ref, o_ref, *, inv_c):
    # Lane-dense path:
    #   x_ref : (R, W) block; each row packs G logical rows of length C (W = G*C, W % 128 == 0)
    #   w_ref : (1, W)  weight tiled G times
    #   s_ref : (W, G)  block-diagonal 0/1 segment matrix;  st_ref : (G, W) its transpose
    x = x_ref[...].astype(jnp.float32)
    w = w_ref[...].astype(jnp.float32)
    seg = s_ref[...]
    seg_t = st_ref[...]
    hi = jax.lax.Precision.HIGHEST
    s1 = jnp.dot(x, seg, preferred_element_type=jnp.float32, precision=hi)        # (R, G)
    s2 = jnp.dot(x * x, seg, preferred_element_type=jnp.float32, precision=hi)    # (R, G)
    mu = s1 * inv_c
    var = jnp.maximum(s2 * inv_c - mu * mu, 0.0)
    inv = jax.lax.rsqrt(var + EPS)                                                 # (R, G)
    scale = jnp.dot(inv, seg_t, preferred_element_type=jnp.float32, precision=hi)  # (R, W)
    o_ref[...] = (x * scale * w).astype(o_ref.dtype)


def biasfree_layernorm(x, weight, *, block_rows=None):
    """x: (..., C), weight: (C,). Returns the same shape/dtype as x."""
    orig_shape = x.shape
    C = orig_shape[-1]
    assert weight.shape == (C,)
    n_rows = 1
    for d in orig_shape[:-1]:
        n_rows *= d
    x2 = x.reshape(n_rows, C)
    itemsize = x.dtype.itemsize

    g = 128 // math.gcd(C, 128)                  # logical rows packed per lane-dense row
    use_packed = (g > 1) and (n_rows % g == 0) and (n_rows >= g)

    if use_packed:
        W = g * C
        rows_p = n_rows // g
        xp = x2.reshape(rows_p, W)               # free: contiguous row-major reshape in HBM
        wp = jnp.tile(weight, g).reshape(1, W)
        seg_id = jnp.arange(W, dtype=jnp.int32) // C
        seg = (seg_id[:, None] == jnp.arange(g, dtype=jnp.int32)[None, :]).astype(jnp.float32)
        seg_t = seg.T

        br = block_rows if block_rows is not None else _pick_block_rows(rows_p, W, itemsize)
        br = min(br, rows_p)
        if br < rows_p:
            br = max(8, (br // 8) * 8)
        grid = (pl.cdiv(rows_p, br),)

        out = pl.pallas_call(
            functools.partial(_bfln_packed_kernel, inv_c=1.0 / C),
            out_shape=jax.ShapeDtypeStruct((rows_p, W), x.dtype),
            grid_spec=pltpu.PrefetchScalarGridSpec(
                num_scalar_prefetch=0,
                grid=grid,
                in_specs=[
                    pl.BlockSpec((br, W), lambda i: (i, 0)),
                    pl.BlockSpec((1, W), lambda i: (0, 0)),
                    pl.BlockSpec((W, g), lambda i: (0, 0)),
                    pl.BlockSpec((g, W), lambda i: (0, 0)),
                ],
                out_specs=pl.BlockSpec((br, W), lambda i: (i, 0)),
            ),
            compiler_params=pltpu.CompilerParams(
                dimension_semantics=("parallel",),
                vmem_limit_bytes=_vmem_limit(br, W, itemsize),
            ),
        )(xp, wp, seg, seg_t)
        return out.reshape(orig_shape)

    # Fallback: plain row-tiled path (C already a multiple of 128, or token count not
    # divisible by the packing factor).
    br = block_rows if block_rows is not None else _pick_block_rows(n_rows, C, itemsize)
    br = min(br, n_rows)
    if br < n_rows:
        br = max(8, (br // 8) * 8)
    grid = (pl.cdiv(n_rows, br),)
    w2 = weight.reshape(1, C)

    out = pl.pallas_call(
        _bfln_rows_kernel,
        out_shape=jax.ShapeDtypeStruct((n_rows, C), x.dtype),
        grid_spec=pltpu.PrefetchScalarGridSpec(
            num_scalar_prefetch=0,
            grid=grid,
            in_specs=[
                pl.BlockSpec((br, C), lambda i: (i, 0)),
                pl.BlockSpec((1, C), lambda i: (0, 0)),
            ],
            out_specs=pl.BlockSpec((br, C), lambda i: (i, 0)),
        ),
        compiler_params=pltpu.CompilerParams(
            dimension_semantics=("parallel",),
            vmem_limit_bytes=_vmem_limit(br, C, itemsize),
        ),
    )(x2, w2)
    return out.reshape(orig_shape)


if __name__ == "__main__":
    key = jax.random.PRNGKey(0)

    def reference(x, w):
        xf = x.astype(jnp.float32)
        mu = jnp.mean(xf, axis=-1, keepdims=True)
        var = jnp.mean((xf - mu) ** 2, axis=-1, keepdims=True)
        return (xf / jnp.sqrt(var + EPS) * w.astype(jnp.float32)).astype(x.dtype)

    cases = [
        # (name, shape, forced block_rows)
        ("packed, single block       C=48 ", (2, 8, 8, 48), None),
        ("packed, ragged multi-block C=48 ", (2, 12, 12, 48), 16),
        ("already lane-dense         C=256", (2, 16, 256), None),
        ("fallback row path          C=32 ", (3, 7, 32), None),
    ]
    for name, shape, br in cases:
        key, kx, kw = jax.random.split(key, 3)
        C = shape[-1]
        x = jax.random.normal(kx, shape, dtype=jnp.float32)
        # parameter init is torch.ones(C); use a perturbed weight to exercise the multiply
        w = 1.0 + 0.1 * jax.random.normal(kw, (C,), dtype=jnp.float32)
        out = jax.block_until_ready(biasfree_layernorm(x, w, block_rows=br))
        ref = reference(x, w)
        assert out.shape == x.shape and out.dtype == x.dtype, name
        err = float(jnp.max(jnp.abs(out.astype(jnp.float32) - ref.astype(jnp.float32))))
        assert err < 1e-4, f"{name}: max abs err {err}"

    print("KERNEL_OK")
</pallas_src>

<mosaic_0001>
module attributes {stable_mosaic.version = 11 : i64} {
  func.func @_bfln_packed_kernel(%arg0: i32, %arg1: memref<16x384xf32, #tpu.memory_space<vmem>>, %arg2: memref<1x384xf32, #tpu.memory_space<vmem>>, %arg3: memref<384x8xf32, #tpu.memory_space<vmem>>, %arg4: memref<8x384xf32, #tpu.memory_space<vmem>>, %arg5: memref<16x384xf32, #tpu.memory_space<vmem>>) attributes {dimension_semantics = [#tpu.dimension_semantics<parallel>], iteration_bounds = array<i64: 1>, scalar_prefetch = 0 : i64, scratch_operands = 0 : i64, tpu.core_type = #tpu.core_type<tc>, window_params = [{transform_indices = @transform_0, window_bounds = array<i64: 16, 384>}, {pipeline_mode = #tpu.pipeline_mode<synchronous>, transform_indices = @transform_1, window_bounds = array<i64: 1, 384>}, {pipeline_mode = #tpu.pipeline_mode<synchronous>, transform_indices = @transform_2, window_bounds = array<i64: 384, 8>}, {pipeline_mode = #tpu.pipeline_mode<synchronous>, transform_indices = @transform_3, window_bounds = array<i64: 8, 384>}, {transform_indices = @transform_4, window_bounds = array<i64: 16, 384>}]} {
    %c0 = arith.constant 0 : index
    %c0_0 = arith.constant 0 : index
    %0 = vector.load %arg1[%c0, %c0_0] : memref<16x384xf32, #tpu.memory_space<vmem>>, vector<16x384xf32>
    %c0_1 = arith.constant 0 : index
    %c0_2 = arith.constant 0 : index
    %1 = vector.load %arg2[%c0_1, %c0_2] : memref<1x384xf32, #tpu.memory_space<vmem>>, vector<1x384xf32>
    %c0_3 = arith.constant 0 : index
    %c0_4 = arith.constant 0 : index
    %2 = vector.load %arg3[%c0_3, %c0_4] : memref<384x8xf32, #tpu.memory_space<vmem>>, vector<384x8xf32>
    %c0_5 = arith.constant 0 : index
    %c0_6 = arith.constant 0 : index
    %3 = vector.load %arg4[%c0_5, %c0_6] : memref<8x384xf32, #tpu.memory_space<vmem>>, vector<8x384xf32>
    %cst = arith.constant dense<0.000000e+00> : vector<16x8xf32>
    %4 = tpu.matmul %0, %2, %cst {dimension_numbers = #tpu.dot_dimension_numbers<[1], [0], [0], [1], [0, 0, 1, 1], [], []>, precision = #tpu.contract_precision<fp32>} : vector<16x384xf32>, vector<384x8xf32>, vector<16x8xf32> -> vector<16x8xf32>
    %5 = arith.mulf %0, %0 : vector<16x384xf32>
    %cst_7 = arith.constant dense<0.000000e+00> : vector<16x8xf32>
    %6 = tpu.matmul %5, %2, %cst_7 {dimension_numbers = #tpu.dot_dimension_numbers<[1], [0], [0], [1], [0, 0, 1, 1], [], []>, precision = #tpu.contract_precision<fp32>} : vector<16x384xf32>, vector<384x8xf32>, vector<16x8xf32> -> vector<16x8xf32>
    %cst_8 = arith.constant 0.020833334 : f32
    %7 = vector.broadcast %cst_8 : f32 to vector<16x8xf32>
    %8 = arith.mulf %4, %7 : vector<16x8xf32>
    %cst_9 = arith.constant 0.020833334 : f32
    %9 = vector.broadcast %cst_9 : f32 to vector<16x8xf32>
    %10 = arith.mulf %6, %9 : vector<16x8xf32>
    %11 = arith.mulf %8, %8 : vector<16x8xf32>
    %12 = arith.subf %10, %11 : vector<16x8xf32>
    %cst_10 = arith.constant 0.000000e+00 : f32
    %13 = vector.broadcast %cst_10 : f32 to vector<16x8xf32>
    %14 = arith.maximumf %12, %13 : vector<16x8xf32>
    %cst_11 = arith.constant 9.99999974E-6 : f32
    %15 = vector.broadcast %cst_11 : f32 to vector<16x8xf32>
    %16 = arith.addf %14, %15 : vector<16x8xf32>
    %17 = math.rsqrt %16 : vector<16x8xf32>
    %cst_12 = arith.constant dense<0.000000e+00> : vector<16x384xf32>
    %18 = tpu.matmul %17, %3, %cst_12 {dimension_numbers = #tpu.dot_dimension_numbers<[1], [0], [0], [1], [0, 0, 1, 1], [], []>, precision = #tpu.contract_precision<fp32>} : vector<16x8xf32>, vector<8x384xf32>, vector<16x384xf32> -> vector<16x384xf32>
    %19 = arith.mulf %0, %18 : vector<16x384xf32>
    %20 = vector.broadcast %1 : vector<1x384xf32> to vector<16x384xf32>
    %21 = arith.mulf %19, %20 : vector<16x384xf32>
    %c0_13 = arith.constant 0 : index
    %c0_14 = arith.constant 0 : index
    %22 = vector.load %arg5[%c0_13, %c0_14] : memref<16x384xf32, #tpu.memory_space<vmem>>, vector<16x384xf32>
    tpu.vector_store %arg5[%c0_13, %c0_14], %21 {strides = array<i32>} : memref<16x384xf32, #tpu.memory_space<vmem>>, vector<16x384xf32>,
    return
  }
  func.func @transform_0(%arg0: i32) -> (i32, i32) {
    %c0_i32 = arith.constant 0 : i32
    %c0_i32_0 = arith.constant 0 : i32
    return %arg0, %c0_i32 : i32, i32
  }
  func.func @transform_1(%arg0: i32) -> (i32, i32) {
    %c0_i32 = arith.constant 0 : i32
    %c0_i32_0 = arith.constant 0 : i32
    %c0_i32_1 = arith.constant 0 : i32
    return %c0_i32, %c0_i32_0 : i32, i32
  }
  func.func @transform_2(%arg0: i32) -> (i32, i32) {
    %c0_i32 = arith.constant 0 : i32
    %c0_i32_0 = arith.constant 0 : i32
    %c0_i32_1 = arith.constant 0 : i32
    return %c0_i32, %c0_i32_0 : i32, i32
  }
  func.func @transform_3(%arg0: i32) -> (i32, i32) {
    %c0_i32 = arith.constant 0 : i32
    %c0_i32_0 = arith.constant 0 : i32
    %c0_i32_1 = arith.constant 0 : i32
    return %c0_i32, %c0_i32_0 : i32, i32
  }
  func.func @transform_4(%arg0: i32) -> (i32, i32) {
    %c0_i32 = arith.constant 0 : i32
    %c0_i32_0 = arith.constant 0 : i32
    return %arg0, %c0_i32 : i32, i32
  }
}

</mosaic_0001>

<llo_original>
// kernel: tpu_custom_call.1
$region0: #{tpu_custom_call.1}
  #allocation0 [shape = 'u32[]', space=smem, size = 0x4, offset = 0x4, fixed_abs, tag = 'smem constant byte address 0x4 - core index']
  #allocation1 [shape = 'u32[72,128]{1,0:T(1,128)}', space=vmem, size = 0x9000, scoped, tag = 'internal scratch']
  %s0 = inlined_call_operand.vmem [shape: f32[16,384], index: 0, kind: input, shape index: {}]
  %s1 = inlined_call_operand.vmem [shape: f32[1,384], index: 1, kind: input, shape index: {}]
  %s2 = inlined_call_operand.vmem [shape: f32[384,8], index: 2, kind: input, shape index: {}]
  %s3 = inlined_call_operand.vmem [shape: f32[8,384], index: 3, kind: input, shape index: {}]
  %s4 = inlined_call_operand.hbm [shape: f32[16,384], index: 4, kind: output, shape index: {}]
  %s5 = sld [smem:[#allocation0]]
  $region26: #{tpu_custom_call.1} parent=0
    _
  %s7 = ssub.s32 1, %s5
  %s8 = scalar_select 0, %s7, %s5
  $region1: #{tpu_custom_call.1} parent=0
    #allocation2 [shape = 'u8[24576]{0}', space=vmem, size = 0x6000, scoped, tag = 'output window, operand 0, single buffered']
    #allocation3 [shape = 's32[1]{0}', space=sflag, size = 0x4, scoped, tag = 'scoped memory for tpu_custom_call.1']
    %9 = vsyncpa [#allocation3], 0
    // Predicated region
    $region2: #{tpu_custom_call.1} parent=1 // pred_check
      _
    $region3: #{tpu_custom_call.1} parent=1 // pred_check_branch
      %11 = sbr.rel (0) target = $region5
    $region4: #{tpu_custom_call.1} parent=1 // pred_region
      _
    $region5: #{tpu_custom_call.1} parent=1 // pred_fallthru
      _
    // Predicated region
    $region6: #{tpu_custom_call.1} parent=1 // pred_check
      _
    $region7: #{tpu_custom_call.1} parent=1 // pred_check_branch
      %13 = sbr.rel (0) target = $region9
    $region8: #{tpu_custom_call.1} parent=1 // pred_region
      _
    $region9: #{tpu_custom_call.1} parent=1 // pred_fallthru
      _
    // Predicated region
    $region10: #{tpu_custom_call.1} parent=1 // pred_check
      _
    $region11: #{tpu_custom_call.1} parent=1 // pred_check_branch
      %15 = sbr.rel (0) target = $region13
    $region12: #{tpu_custom_call.1} parent=1 // pred_region
      _
    $region13: #{tpu_custom_call.1} parent=1 // pred_fallthru
      _
    // Predicated region
    $region14: #{tpu_custom_call.1} parent=1 // pred_check
      _
    $region15: #{tpu_custom_call.1} parent=1 // pred_check_branch
      %17 = sbr.rel (0) target = $region17
    $region16: #{tpu_custom_call.1} parent=1 // pred_region
      _
    $region17: #{tpu_custom_call.1} parent=1 // pred_fallthru
      _
    %v18 = vld [vmem:[%s0] sm:$0xff]
    %v19 = vld [vmem:[%s0 + $0x8] sm:$0xff]
    %v20 = vld [vmem:[%s0 + $0x10] sm:$0xff]
    %v21 = vld [vmem:[%s0 + $0x18] sm:$0xff]
    %v22 = vld [vmem:[%s0 + $0x20] sm:$0xff]
    %v23 = vld [vmem:[%s0 + $0x28] sm:$0xff]
    %v24 = vld [vmem:[%s1] sm:$0x7]
    %v25 = vld [vmem:[%s2] sm:$0xff]
    %v26 = vld [vmem:[%s2 + $0x8] sm:$0xff]
    %v27 = vld [vmem:[%s2 + $0x10] sm:$0xff]
    %v28 = vld [vmem:[%s2 + $0x18] sm:$0xff]
    %v29 = vld [vmem:[%s2 + $0x20] sm:$0xff]
    %v30 = vld [vmem:[%s2 + $0x28] sm:$0xff]
    %v31 = vld [vmem:[%s2 + $0x30] sm:$0xff]
    %v32 = vld [vmem:[%s2 + $0x38] sm:$0xff]
    %v33 = vld [vmem:[%s2 + $0x40] sm:$0xff]
    %v34 = vld [vmem:[%s2 + $0x48] sm:$0xff]
    %v35 = vld [vmem:[%s2 + $0x50] sm:$0xff]
    %v36 = vld [vmem:[%s2 + $0x58] sm:$0xff]
    %v37 = vld [vmem:[%s2 + $0x60] sm:$0xff]
    %v38 = vld [vmem:[%s2 + $0x68] sm:$0xff]
    %v39 = vld [vmem:[%s2 + $0x70] sm:$0xff]
    %v40 = vld [vmem:[%s2 + $0x78] sm:$0xff]
    %v41 = vld [vmem:[%s2 + $0x80] sm:$0xff]
    %v42 = vld [vmem:[%s2 + $0x88] sm:$0xff]
    %v43 = vld [vmem:[%s2 + $0x90] sm:$0xff]
    %v44 = vld [vmem:[%s2 + $0x98] sm:$0xff]
    %v45 = vld [vmem:[%s2 + $0xa0] sm:$0xff]
    %v46 = vld [vmem:[%s2 + $0xa8] sm:$0xff]
    %v47 = vld [vmem:[%s2 + $0xb0] sm:$0xff]
    %v48 = vld [vmem:[%s2 + $0xb8] sm:$0xff]
    %v49 = vld [vmem:[%s2 + $0xc0] sm:$0xff]
    %v50 = vld [vmem:[%s2 + $0xc8] sm:$0xff]
    %v51 = vld [vmem:[%s2 + $0xd0] sm:$0xff]
    %v52 = vld [vmem:[%s2 + $0xd8] sm:$0xff]
    %v53 = vld [vmem:[%s2 + $0xe0] sm:$0xff]
    %v54 = vld [vmem:[%s2 + $0xe8] sm:$0xff]
    %v55 = vld [vmem:[%s2 + $0xf0] sm:$0xff]
    %v56 = vld [vmem:[%s2 + $0xf8] sm:$0xff]
    %v57 = vld [vmem:[%s2 + $0x100] sm:$0xff]
    %v58 = vld [vmem:[%s2 + $0x108] sm:$0xff]
    %v59 = vld [vmem:[%s2 + $0x110] sm:$0xff]
    %v60 = vld [vmem:[%s2 + $0x118] sm:$0xff]
    %v61 = vld [vmem:[%s2 + $0x120] sm:$0xff]
    %v62 = vld [vmem:[%s2 + $0x128] sm:$0xff]
    %v63 = vld [vmem:[%s2 + $0x130] sm:$0xff]
    %v64 = vld [vmem:[%s2 + $0x138] sm:$0xff]
    %v65 = vld [vmem:[%s2 + $0x140] sm:$0xff]
    %v66 = vld [vmem:[%s2 + $0x148] sm:$0xff]
    %v67 = vld [vmem:[%s2 + $0x150] sm:$0xff]
    %v68 = vld [vmem:[%s2 + $0x158] sm:$0xff]
    %v69 = vld [vmem:[%s2 + $0x160] sm:$0xff]
    %v70 = vld [vmem:[%s2 + $0x168] sm:$0xff]
    %v71 = vld [vmem:[%s2 + $0x170] sm:$0xff]
    %v72 = vld [vmem:[%s2 + $0x178] sm:$0xff]
    %v73 = vld [vmem:[%s3] sm:$0xff]
    %v74 = vld [vmem:[%s3 + $0x8] sm:$0xff]
    %v75 = vld [vmem:[%s3 + $0x10] sm:$0xff]
    %v76 = vand.u32 %v40, 4294901760
    %77 = vmatpush.msra.mxu0 %v76
    %v78 = vand.u32 %v39, 4294901760
    %79 = vmatpush.msra.mxu0 %v78
    %v80 = vand.u32 %v38, 4294901760
    %81 = vmatpush.msra.mxu0 %v80
    %v82 = vand.u32 %v37, 4294901760
    %83 = vmatpush.msra.mxu0 %v82
    %v84 = vand.u32 %v36, 4294901760
    %85 = vmatpush.msra.mxu0 %v84
    %v86 = vand.u32 %v35, 4294901760
    %87 = vmatpush.msra.mxu0 %v86
    %v88 = vand.u32 %v34, 4294901760
    %89 = vmatpush.msra.mxu0 %v88
    %v90 = vand.u32 %v33, 4294901760
    %91 = vmatpush.msra.mxu0 %v90
    %v92 = vand.u32 %v32, 4294901760
    %93 = vmatpush.msra.mxu0 %v92
    %v94 = vand.u32 %v31, 4294901760
    %95 = vmatpush.msra.mxu0 %v94
    %v96 = vand.u32 %v30, 4294901760
    %97 = vmatpush.msra.mxu0 %v96
    %v98 = vand.u32 %v29, 4294901760
    %99 = vmatpush.msra.mxu0 %v98
    %v100 = vand.u32 %v28, 4294901760
    %101 = vmatpush.msra.mxu0 %v100
    %v102 = vand.u32 %v27, 4294901760
    %103 = vmatpush.msra.mxu0 %v102
    %v104 = vand.u32 %v26, 4294901760
    %105 = vmatpush.msra.mxu0 %v104
    %v106 = vand.u32 %v25, 4294901760
    %107 = vmatpush.msra.mxu0 %v106
    %v108 = vand.u32 %v18, 4294901760
    %v109 = vsub.f32 %v18, %v108
    %v110 = vand.u32 %v109, 4294901760
    %v111 = vsub.f32 %v109, %v110
    %v112 = vand.u32 %v111, 4294901760
    %113 = vmatmul.f32.gmra.mxu0 %v112
    %v114 = vpop.f32.mrf.mxu0
    %v115 = vadd.f32 0.0, %v114
    %v116 = vand.u32 %v21, 4294901760
    %v117 = vsub.f32 %v21, %v116
    %v118 = vand.u32 %v117, 4294901760
    %v119 = vsub.f32 %v117, %v118
    %v120 = vand.u32 %v119, 4294901760
    %121 = vmatmul.f32.gmra.mxu0 %v120
    %v122 = vpop.f32.mrf.mxu0
    %v123 = vadd.f32 0.0, %v122
    %124 = vdwg.mxu0
    %v125 = vand.u32 %v40, 4294901760
    %v126 = vsub.f32 %v40, %v125
    %v127 = vand.u32 %v126, 4294901760
    %v128 = vsub.f32 %v126, %v127
    %v129 = vand.u32 %v128, 4294901760
    %130 = vmatpush.msra.mxu0 %v129
    %v131 = vand.u32 %v39, 4294901760
    %v132 = vsub.f32 %v39, %v131
    %v133 = vand.u32 %v132, 4294901760
    %v134 = vsub.f32 %v132, %v133
    %v135 = vand.u32 %v134, 4294901760
    %136 = vmatpush.msra.mxu0 %v135
    %v137 = vand.u32 %v38, 4294901760
    %v138 = vsub.f32 %v38, %v137
    %v139 = vand.u32 %v138, 4294901760
    %v140 = vsub.f32 %v138, %v139
    %v141 = vand.u32 %v140, 4294901760
    %142 = vmatpush.msra.mxu0 %v141
    %v143 = vand.u32 %v37, 4294901760
    %v144 = vsub.f32 %v37, %v143
    %v145 = vand.u32 %v144, 4294901760
    %v146 = vsub.f32 %v144, %v145
    %v147 = vand.u32 %v146, 4294901760
    %148 = vmatpush.msra.mxu0 %v147
    %v149 = vand.u32 %v36, 4294901760
    %v150 = vsub.f32 %v36, %v149
    %v151 = vand.u32 %v150, 4294901760
    %v152 = vsub.f32 %v150, %v151
    %v153 = vand.u32 %v152, 4294901760
    %154 = vmatpush.msra.mxu0 %v153
    %v155 = vand.u32 %v35, 4294901760
    %v156 = vsub.f32 %v35, %v155
    %v157 = vand.u32 %v156, 4294901760
    %v158 = vsub.f32 %v156, %v157
    %v159 = vand.u32 %v158, 4294901760
    %160 = vmatpush.msra.mxu0 %v159
    %v161 = vand.u32 %v34, 4294901760
    %v162 = vsub.f32 %v34, %v161
    %v163 = vand.u32 %v162, 4294901760
    %v164 = vsub.f32 %v162, %v163
    %v165 = vand.u32 %v164, 4294901760
    %166 = vmatpush.msra.mxu0 %v165
    %v167 = vand.u32 %v33, 4294901760
    %v168 = vsub.f32 %v33, %v167
    %v169 = vand.u32 %v168, 4294901760
    %v170 = vsub.f32 %v168, %v169
    %v171 = vand.u32 %v170, 4294901760
    %172 = vmatpush.msra.mxu0 %v171
    %v173 = vand.u32 %v32, 4294901760
    %v174 = vsub.f32 %v32, %v173
    %v175 = vand.u32 %v174, 4294901760
    %v176 = vsub.f32 %v174, %v175
    %v177 = vand.u32 %v176, 4294901760
    %178 = vmatpush.msra.mxu0 %v177
    %v179 = vand.u32 %v31, 4294901760
    %v180 = vsub.f32 %v31, %v179
    %v181 = vand.u32 %v180, 4294901760
    %v182 = vsub.f32 %v180, %v181
    %v183 = vand.u32 %v182, 4294901760
    %184 = vmatpush.msra.mxu0 %v183
    %v185 = vand.u32 %v30, 4294901760
    %v186 = vsub.f32 %v30, %v185
    %v187 = vand.u32 %v186, 4294901760
    %v188 = vsub.f32 %v186, %v187
    %v189 = vand.u32 %v188, 4294901760
    %190 = vmatpush.msra.mxu0 %v189
    %v191 = vand.u32 %v29, 4294901760
    %v192 = vsub.f32 %v29, %v191
    %v193 = vand.u32 %v192, 4294901760
    %v194 = vsub.f32 %v192, %v193
    %v195 = vand.u32 %v194, 4294901760
    %196 = vmatpush.msra.mxu0 %v195
    %v197 = vand.u32 %v28, 4294901760
    %v198 = vsub.f32 %v28, %v197
    %v199 = vand.u32 %v198, 4294901760
    %v200 = vsub.f32 %v198, %v199
    %v201 = vand.u32 %v200, 4294901760
    %202 = vmatpush.msra.mxu0 %v201
    %v203 = vand.u32 %v27, 4294901760
    %v204 = vsub.f32 %v27, %v203
    %v205 = vand.u32 %v204, 4294901760
    %v206 = vsub.f32 %v204, %v205
    %v207 = vand.u32 %v206, 4294901760
    %208 = vmatpush.msra.mxu0 %v207
    %v209 = vand.u32 %v26, 4294901760
    %v210 = vsub.f32 %v26, %v209
    %v211 = vand.u32 %v210, 4294901760
    %v212 = vsub.f32 %v210, %v211
    %v213 = vand.u32 %v212, 4294901760
    %214 = vmatpush.msra.mxu0 %v213
    %v215 = vand.u32 %v25, 4294901760
    %v216 = vsub.f32 %v25, %v215
    %v217 = vand.u32 %v216, 4294901760
    %v218 = vsub.f32 %v216, %v217
    %v219 = vand.u32 %v218, 4294901760
    %220 = vmatpush.msra.mxu0 %v219
    %v221 = vand.u32 %v18, 4294901760
    %222 = vmatmul.f32.gmra.mxu0 %v221
    %v223 = vpop.f32.mrf.mxu0
    %v224 = vadd.f32 %v115, %v223
    %v225 = vand.u32 %v21, 4294901760
    %226 = vmatmul.f32.gmra.mxu0 %v225
    %v227 = vpop.f32.mrf.mxu0
    %v228 = vadd.f32 %v123, %v227
    %229 = vdwg.mxu0
    %v230 = vand.u32 %v40, 4294901760
    %v231 = vsub.f32 %v40, %v230
    %232 = vmatpush.msra.mxu0 %v231
    %v233 = vand.u32 %v39, 4294901760
    %v234 = vsub.f32 %v39, %v233
    %235 = vmatpush.msra.mxu0 %v234
    %v236 = vand.u32 %v38, 4294901760
    %v237 = vsub.f32 %v38, %v236
    %238 = vmatpush.msra.mxu0 %v237
    %v239 = vand.u32 %v37, 4294901760
    %v240 = vsub.f32 %v37, %v239
    %241 = vmatpush.msra.mxu0 %v240
    %v242 = vand.u32 %v36, 4294901760
    %v243 = vsub.f32 %v36, %v242
    %244 = vmatpush.msra.mxu0 %v243
    %v245 = vand.u32 %v35, 4294901760
    %v246 = vsub.f32 %v35, %v245
    %247 = vmatpush.msra.mxu0 %v246
    %v248 = vand.u32 %v34, 4294901760
    %v249 = vsub.f32 %v34, %v248
    %250 = vmatpush.msra.mxu0 %v249
    %v251 = vand.u32 %v33, 4294901760
    %v252 = vsub.f32 %v33, %v251
    %253 = vmatpush.msra.mxu0 %v252
    %v254 = vand.u32 %v32, 4294901760
    %v255 = vsub.f32 %v32, %v254
    %256 = vmatpush.msra.mxu0 %v255
    %v257 = vand.u32 %v31, 4294901760
    %v258 = vsub.f32 %v31, %v257
    %259 = vmatpush.msra.mxu0 %v258
    %v260 = vand.u32 %v30, 4294901760
    %v261 = vsub.f32 %v30, %v260
    %262 = vmatpush.msra.mxu0 %v261
    %v263 = vand.u32 %v29, 4294901760
    %v264 = vsub.f32 %v29, %v263
    %265 = vmatpush.msra.mxu0 %v264
    %v266 = vand.u32 %v28, 4294901760
    %v267 = vsub.f32 %v28, %v266
    %268 = vmatpush.msra.mxu0 %v267
    %v269 = vand.u32 %v27, 4294901760
    %v270 = vsub.f32 %v27, %v269
    %271 = vmatpush.msra.mxu0 %v270
    %v272 = vand.u32 %v26, 4294901760
    %v273 = vsub.f32 %v26, %v272
    %274 = vmatpush.msra.mxu0 %v273
    %v275 = vand.u32 %v25, 4294901760
    %v276 = vsub.f32 %v25, %v275
    %277 = vmatpush.msra.mxu0 %v276
    %v278 = vand.u32 %v18, 4294901760
    %v279 = vsub.f32 %v18, %v278
    %280 = vmatmul.f32.gmra.mxu0 %v279
    %v281 = vpop.f32.mrf.mxu0
    %v282 = vadd.f32 %v224, %v281
    %v283 = vand.u32 %v21, 4294901760
    %v284 = vsub.f32 %v21, %v283
    %285 = vmatmul.f32.gmra.mxu0 %v284
    %v286 = vpop.f32.mrf.mxu0
    %v287 = vadd.f32 %v228, %v286
    %288 = vdwg.mxu0
    %v289 = vand.u32 %v40, 4294901760
    %290 = vmatpush.msra.mxu0 %v289
    %v291 = vand.u32 %v39, 4294901760
    %292 = vmatpush.msra.mxu0 %v291
    %v293 = vand.u32 %v38, 4294901760
    %294 = vmatpush.msra.mxu0 %v293
    %v295 = vand.u32 %v37, 4294901760
    %296 = vmatpush.msra.mxu0 %v295
    %v297 = vand.u32 %v36, 4294901760
    %298 = vmatpush.msra.mxu0 %v297
    %v299 = vand.u32 %v35, 4294901760
    %300 = vmatpush.msra.mxu0 %v299
    %v301 = vand.u32 %v34, 4294901760
    %302 = vmatpush.msra.mxu0 %v301
    %v303 = vand.u32 %v33, 4294901760
    %304 = vmatpush.msra.mxu0 %v303
    %v305 = vand.u32 %v32, 4294901760
    %306 = vmatpush.msra.mxu0 %v305
    %v307 = vand.u32 %v31, 4294901760
    %308 = vmatpush.msra.mxu0 %v307
    %v309 = vand.u32 %v30, 4294901760
    %310 = vmatpush.msra.mxu0 %v309
    %v311 = vand.u32 %v29, 4294901760
    %312 = vmatpush.msra.mxu0 %v311
    %v313 = vand.u32 %v28, 4294901760
    %314 = vmatpush.msra.mxu0 %v313
    %v315 = vand.u32 %v27, 4294901760
    %316 = vmatpush.msra.mxu0 %v315
    %v317 = vand.u32 %v26, 4294901760
    %318 = vmatpush.msra.mxu0 %v317
    %v319 = vand.u32 %v25, 4294901760
    %320 = vmatpush.msra.mxu0 %v319
    %v321 = vand.u32 %v18, 4294901760
    %v322 = vsub.f32 %v18, %v321
    %v323 = vand.u32 %v322, 4294901760
    %324 = vmatmul.f32.gmra.mxu0 %v323
    %v325 = vpop.f32.mrf.mxu0
    %v326 = vadd.f32 %v282, %v325
    %v327 = vand.u32 %v21, 4294901760
    %v328 = vsub.f32 %v21, %v327
    %v329 = vand.u32 %v328, 4294901760
    %330 = vmatmul.f32.gmra.mxu0 %v329
    %v331 = vpop.f32.mrf.mxu0
    %v332 = vadd.f32 %v287, %v331
    %333 = vdwg.mxu0
    %v334 = vand.u32 %v40, 4294901760
    %v335 = vsub.f32 %v40, %v334
    %v336 = vand.u32 %v335, 4294901760
    %337 = vmatpush.msra.mxu0 %v336
    %v338 = vand.u32 %v39, 4294901760
    %v339 = vsub.f32 %v39, %v338
    %v340 = vand.u32 %v339, 4294901760
    %341 = vmatpush.msra.mxu0 %v340
    %v342 = vand.u32 %v38, 4294901760
    %v343 = vsub.f32 %v38, %v342
    %v344 = vand.u32 %v343, 4294901760
    %345 = vmatpush.msra.mxu0 %v344
    %v346 = vand.u32 %v37, 4294901760
    %v347 = vsub.f32 %v37, %v346
    %v348 = vand.u32 %v347, 4294901760
    %349 = vmatpush.msra.mxu0 %v348
    %v350 = vand.u32 %v36, 4294901760
    %v351 = vsub.f32 %v36, %v350
    %v352 = vand.u32 %v351, 4294901760
    %353 = vmatpush.msra.mxu0 %v352
    %v354 = vand.u32 %v35, 4294901760
    %v355 = vsub.f32 %v35, %v354
    %v356 = vand.u32 %v355, 4294901760
    %357 = vmatpush.msra.mxu0 %v356
    %v358 = vand.u32 %v34, 4294901760
    %v359 = vsub.f32 %v34, %v358
    %v360 = vand.u32 %v359, 4294901760
    %361 = vmatpush.msra.mxu0 %v360
    %v362 = vand.u32 %v33, 4294901760
    %v363 = vsub.f32 %v33, %v362
    %v364 = vand.u32 %v363, 4294901760
    %365 = vmatpush.msra.mxu0 %v364
    %v366 = vand.u32 %v32, 4294901760
    %v367 = vsub.f32 %v32, %v366
    %v368 = vand.u32 %v367, 4294901760
    %369 = vmatpush.msra.mxu0 %v368
    %v370 = vand.u32 %v31, 4294901760
    %v371 = vsub.f32 %v31, %v370
    %v372 = vand.u32 %v371, 4294901760
    %373 = vmatpush.msra.mxu0 %v372
    %v374 = vand.u32 %v30, 4294901760
    %v375 = vsub.f32 %v30, %v374
    %v376 = vand.u32 %v375, 4294901760
    %377 = vmatpush.msra.mxu0 %v376
    %v378 = vand.u32 %v29, 4294901760
    %v379 = vsub.f32 %v29, %v378
    %v380 = vand.u32 %v379, 4294901760
    %381 = vmatpush.msra.mxu0 %v380
    %v382 = vand.u32 %v28, 4294901760
    %v383 = vsub.f32 %v28, %v382
    %v384 = vand.u32 %v383, 4294901760
    %385 = vmatpush.msra.mxu0 %v384
    %v386 = vand.u32 %v27, 4294901760
    %v387 = vsub.f32 %v27, %v386
    %v388 = vand.u32 %v387, 4294901760
    %389 = vmatpush.msra.mxu0 %v388
    %v390 = vand.u32 %v26, 4294901760
    %v391 = vsub.f32 %v26, %v390
    %v392 = vand.u32 %v391, 4294901760
    %393 = vmatpush.msra.mxu0 %v392
    %v394 = vand.u32 %v25, 4294901760
    %v395 = vsub.f32 %v25, %v394
    %v396 = vand.u32 %v395, 4294901760
    %397 = vmatpush.msra.mxu0 %v396
    %v398 = vand.u32 %v18, 4294901760
    %399 = vmatmul.f32.gmra.mxu0 %v398
    %v400 = vpop.f32.mrf.mxu0
    %v401 = vadd.f32 %v326, %v400
    %v402 = vand.u32 %v21, 4294901760
    %403 = vmatmul.f32.gmra.mxu0 %v402
    %v404 = vpop.f32.mrf.mxu0
    %v405 = vadd.f32 %v332, %v404
    %406 = vdwg.mxu0
    %v407 = vand.u32 %v40, 4294901760
    %408 = vmatpush.msra.mxu0 %v407
    %v409 = vand.u32 %v39, 4294901760
    %410 = vmatpush.msra.mxu0 %v409
    %v411 = vand.u32 %v38, 4294901760
    %412 = vmatpush.msra.mxu0 %v411
    %v413 = vand.u32 %v37, 4294901760
    %414 = vmatpush.msra.mxu0 %v413
    %v415 = vand.u32 %v36, 4294901760
    %416 = vmatpush.msra.mxu0 %v415
    %v417 = vand.u32 %v35, 4294901760
    %418 = vmatpush.msra.mxu0 %v417
    %v419 = vand.u32 %v34, 4294901760
    %420 = vmatpush.msra.mxu0 %v419
    %v421 = vand.u32 %v33, 4294901760
    %422 = vmatpush.msra.mxu0 %v421
    %v423 = vand.u32 %v32, 4294901760
    %424 = vmatpush.msra.mxu0 %v423
    %v425 = vand.u32 %v31, 4294901760
    %426 = vmatpush.msra.mxu0 %v425
    %v427 = vand.u32 %v30, 4294901760
    %428 = vmatpush.msra.mxu0 %v427
    %v429 = vand.u32 %v29, 4294901760
    %430 = vmatpush.msra.mxu0 %v429
    %v431 = vand.u32 %v28, 4294901760
    %432 = vmatpush.msra.mxu0 %v431
    %v433 = vand.u32 %v27, 4294901760
    %434 = vmatpush.msra.mxu0 %v433
    %v435 = vand.u32 %v26, 4294901760
    %436 = vmatpush.msra.mxu0 %v435
    %v437 = vand.u32 %v25, 4294901760
    %438 = vmatpush.msra.mxu0 %v437
    %v439 = vand.u32 %v18, 4294901760
    %440 = vmatmul.f32.gmra.mxu0 %v439
    %v441 = vpop.f32.mrf.mxu0
    %v442 = vadd.f32 %v401, %v441
    %v443 = vand.u32 %v21, 4294901760
    %444 = vmatmul.f32.gmra.mxu0 %v443
    %v445 = vpop.f32.mrf.mxu0
    %v446 = vadd.f32 %v405, %v445
    %447 = vdwg.mxu0
    %v448 = vand.u32 %v56, 4294901760
    %449 = vmatpush.msra.mxu0 %v448
    %v450 = vand.u32 %v55, 4294901760
    %451 = vmatpush.msra.mxu0 %v450
    %v452 = vand.u32 %v54, 4294901760
    %453 = vmatpush.msra.mxu0 %v452
    %v454 = vand.u32 %v53, 4294901760
    %455 = vmatpush.msra.mxu0 %v454
    %v456 = vand.u32 %v52, 4294901760
    %457 = vmatpush.msra.mxu0 %v456
    %v458 = vand.u32 %v51, 4294901760
    %459 = vmatpush.msra.mxu0 %v458
    %v460 = vand.u32 %v50, 4294901760
    %461 = vmatpush.msra.mxu0 %v460
    %v462 = vand.u32 %v49, 4294901760
    %463 = vmatpush.msra.mxu0 %v462
    %v464 = vand.u32 %v48, 4294901760
    %465 = vmatpush.msra.mxu0 %v464
    %v466 = vand.u32 %v47, 4294901760
    %467 = vmatpush.msra.mxu0 %v466
    %v468 = vand.u32 %v46, 4294901760
    %469 = vmatpush.msra.mxu0 %v468
    %v470 = vand.u32 %v45, 4294901760
    %471 = vmatpush.msra.mxu0 %v470
    %v472 = vand.u32 %v44, 4294901760
    %473 = vmatpush.msra.mxu0 %v472
    %v474 = vand.u32 %v43, 4294901760
    %475 = vmatpush.msra.mxu0 %v474
    %v476 = vand.u32 %v42, 4294901760
    %477 = vmatpush.msra.mxu0 %v476
    %v478 = vand.u32 %v41, 4294901760
    %479 = vmatpush.msra.mxu0 %v478
    %v480 = vand.u32 %v19, 4294901760
    %v481 = vsub.f32 %v19, %v480
    %v482 = vand.u32 %v481, 4294901760
    %v483 = vsub.f32 %v481, %v482
    %v484 = vand.u32 %v483, 4294901760
    %485 = vmatmul.f32.gmra.mxu0 %v484
    %v486 = vpop.f32.mrf.mxu0
    %v487 = vadd.f32 %v442, %v486
    %v488 = vand.u32 %v22, 4294901760
    %v489 = vsub.f32 %v22, %v488
    %v490 = vand.u32 %v489, 4294901760
    %v491 = vsub.f32 %v489, %v490
    %v492 = vand.u32 %v491, 4294901760
    %493 = vmatmul.f32.gmra.mxu0 %v492
    %v494 = vpop.f32.mrf.mxu0
    %v495 = vadd.f32 %v446, %v494
    %496 = vdwg.mxu0
    %v497 = vand.u32 %v56, 4294901760
    %v498 = vsub.f32 %v56, %v497
    %v499 = vand.u32 %v498, 4294901760
    %v500 = vsub.f32 %v498, %v499
    %v501 = vand.u32 %v500, 4294901760
    %502 = vmatpush.msra.mxu0 %v501
    %v503 = vand.u32 %v55, 4294901760
    %v504 = vsub.f32 %v55, %v503
    %v505 = vand.u32 %v504, 4294901760
    %v506 = vsub.f32 %v504, %v505
    %v507 = vand.u32 %v506, 4294901760
    %508 = vmatpush.msra.mxu0 %v507
    %v509 = vand.u32 %v54, 4294901760
    %v510 = vsub.f32 %v54, %v509
    %v511 = vand.u32 %v510, 4294901760
    %v512 = vsub.f32 %v510, %v511
    %v513 = vand.u32 %v512, 4294901760
    %514 = vmatpush.msra.mxu0 %v513
    %v515 = vand.u32 %v53, 4294901760
    %v516 = vsub.f32 %v53, %v515
    %v517 = vand.u32 %v516, 4294901760
    %v518 = vsub.f32 %v516, %v517
    %v519 = vand.u32 %v518, 4294901760
    %520 = vmatpush.msra.mxu0 %v519
    %v521 = vand.u32 %v52, 4294901760
    %v522 = vsub.f32 %v52, %v521
    %v523 = vand.u32 %v522, 4294901760
    %v524 = vsub.f32 %v522, %v523
    %v525 = vand.u32 %v524, 4294901760
    %526 = vmatpush.msra.mxu0 %v525
    %v527 = vand.u32 %v51, 4294901760
    %v528 = vsub.f32 %v51, %v527
    %v529 = vand.u32 %v528, 4294901760
    %v530 = vsub.f32 %v528, %v529
    %v531 = vand.u32 %v530, 4294901760
    %532 = vmatpush.msra.mxu0 %v531
    %v533 = vand.u32 %v50, 4294901760
    %v534 = vsub.f32 %v50, %v533
    %v535 = vand.u32 %v534, 4294901760
    %v536 = vsub.f32 %v534, %v535
    %v537 = vand.u32 %v536, 4294901760
    %538 = vmatpush.msra.mxu0 %v537
    %v539 = vand.u32 %v49, 4294901760
    %v540 = vsub.f32 %v49, %v539
    %v541 = vand.u32 %v540, 4294901760
    %v542 = vsub.f32 %v540, %v541
    %v543 = vand.u32 %v542, 4294901760
    %544 = vmatpush.msra.mxu0 %v543
    %v545 = vand.u32 %v48, 4294901760
    %v546 = vsub.f32 %v48, %v545
    %v547 = vand.u32 %v546, 4294901760
    %v548 = vsub.f32 %v546, %v547
    %v549 = vand.u32 %v548, 4294901760
    %550 = vmatpush.msra.mxu0 %v549
    %v551 = vand.u32 %v47, 4294901760
    %v552 = vsub.f32 %v47, %v551
    %v553 = vand.u32 %v552, 4294901760
    %v554 = vsub.f32 %v552, %v553
    %v555 = vand.u32 %v554, 4294901760
    %556 = vmatpush.msra.mxu0 %v555
    %v557 = vand.u32 %v46, 4294901760
    %v558 = vsub.f32 %v46, %v557
    %v559 = vand.u32 %v558, 4294901760
    %v560 = vsub.f32 %v558, %v559
    %v561 = vand.u32 %v560, 4294901760
    %562 = vmatpush.msra.mxu0 %v561
    %v563 = vand.u32 %v45, 4294901760
    %v564 = vsub.f32 %v45, %v563
    %v565 = vand.u32 %v564, 4294901760
    %v566 = vsub.f32 %v564, %v565
    %v567 = vand.u32 %v566, 4294901760
    %568 = vmatpush.msra.mxu0 %v567
    %v569 = vand.u32 %v44, 4294901760
    %v570 = vsub.f32 %v44, %v569
    %v571 = vand.u32 %v570, 4294901760
    %v572 = vsub.f32 %v570, %v571
    %v573 = vand.u32 %v572, 4294901760
    %574 = vmatpush.msra.mxu0 %v573
    %v575 = vand.u32 %v43, 4294901760
    %v576 = vsub.f32 %v43, %v575
    %v577 = vand.u32 %v576, 4294901760
    %v578 = vsub.f32 %v576, %v577
    %v579 = vand.u32 %v578, 4294901760
    %580 = vmatpush.msra.mxu0 %v579
    %v581 = vand.u32 %v42, 4294901760
    %v582 = vsub.f32 %v42, %v581
    %v583 = vand.u32 %v582, 4294901760
    %v584 = vsub.f32 %v582, %v583
    %v585 = vand.u32 %v584, 4294901760
    %586 = vmatpush.msra.mxu0 %v585
    %v587 = vand.u32 %v41, 4294901760
    %v588 = vsub.f32 %v41, %v587
    %v589 = vand.u32 %v588, 4294901760
    %v590 = vsub.f32 %v588, %v589
    %v591 = vand.u32 %v590, 4294901760
    %592 = vmatpush.msra.mxu0 %v591
    %v593 = vand.u32 %v19, 4294901760
    %594 = vmatmul.f32.gmra.mxu0 %v593
    %v595 = vpop.f32.mrf.mxu0
    %v596 = vadd.f32 %v487, %v595
    %v597 = vand.u32 %v22, 4294901760
    %598 = vmatmul.f32.gmra.mxu0 %v597
    %v599 = vpop.f32.mrf.mxu0
    %v600 = vadd.f32 %v495, %v599
    %601 = vdwg.mxu0
    %v602 = vand.u32 %v56, 4294901760
    %v603 = vsub.f32 %v56, %v602
    %604 = vmatpush.msra.mxu0 %v603
    %v605 = vand.u32 %v55, 4294901760
    %v606 = vsub.f32 %v55, %v605
    %607 = vmatpush.msra.mxu0 %v606
    %v608 = vand.u32 %v54, 4294901760
    %v609 = vsub.f32 %v54, %v608
    %610 = vmatpush.msra.mxu0 %v609
    %v611 = vand.u32 %v53, 4294901760
    %v612 = vsub.f32 %v53, %v611
    %613 = vmatpush.msra.mxu0 %v612
    %v614 = vand.u32 %v52, 4294901760
    %v615 = vsub.f32 %v52, %v614
    %616 = vmatpush.msra.mxu0 %v615
    %v617 = vand.u32 %v51, 4294901760
    %v618 = vsub.f32 %v51, %v617
    %619 = vmatpush.msra.mxu0 %v618
    %v620 = vand.u32 %v50, 4294901760
    %v621 = vsub.f32 %v50, %v620
    %622 = vmatpush.msra.mxu0 %v621
    %v623 = vand.u32 %v49, 4294901760
    %v624 = vsub.f32 %v49, %v623
    %625 = vmatpush.msra.mxu0 %v624
    %v626 = vand.u32 %v48, 4294901760
    %v627 = vsub.f32 %v48, %v626
    %628 = vmatpush.msra.mxu0 %v627
    %v629 = vand.u32 %v47, 4294901760
    %v630 = vsub.f32 %v47, %v629
    %631 = vmatpush.msra.mxu0 %v630
    %v632 = vand.u32 %v46, 4294901760
    %v633 = vsub.f32 %v46, %v632
    %634 = vmatpush.msra.mxu0 %v633
    %v635 = vand.u32 %v45, 4294901760
    %v636 = vsub.f32 %v45, %v635
    %637 = vmatpush.msra.mxu0 %v636
    %v638 = vand.u32 %v44, 4294901760
    %v639 = vsub.f32 %v44, %v638
    %640 = vmatpush.msra.mxu0 %v639
    %v641 = vand.u32 %v43, 4294901760
    %v642 = vsub.f32 %v43, %v641
    %643 = vmatpush.msra.mxu0 %v642
    %v644 = vand.u32 %v42, 4294901760
    %v645 = vsub.f32 %v42, %v644
    %646 = vmatpush.msra.mxu0 %v645
    %v647 = vand.u32 %v41, 4294901760
    %v648 = vsub.f32 %v41, %v647
    %649 = vmatpush.msra.mxu0 %v648
    %v650 = vand.u32 %v19, 4294901760
    %v651 = vsub.f32 %v19, %v650
    %652 = vmatmul.f32.gmra.mxu0 %v651
    %v653 = vpop.f32.mrf.mxu0
    %v654 = vadd.f32 %v596, %v653
    %v655 = vand.u32 %v22, 4294901760
    %v656 = vsub.f32 %v22, %v655
    %657 = vmatmul.f32.gmra.mxu0 %v656
    %v658 = vpop.f32.mrf.mxu0
    %v659 = vadd.f32 %v600, %v658
    %660 = vdwg.mxu0
    %v661 = vand.u32 %v56, 4294901760
    %662 = vmatpush.msra.mxu0 %v661
    %v663 = vand.u32 %v55, 4294901760
    %664 = vmatpush.msra.mxu0 %v663
    %v665 = vand.u32 %v54, 4294901760
    %666 = vmatpush.msra.mxu0 %v665
    %v667 = vand.u32 %v53, 4294901760
    %668 = vmatpush.msra.mxu0 %v667
    %v669 = vand.u32 %v52, 4294901760
    %670 = vmatpush.msra.mxu0 %v669
    %v671 = vand.u32 %v51, 4294901760
    %672 = vmatpush.msra.mxu0 %v671
    %v673 = vand.u32 %v50, 4294901760
    %674 = vmatpush.msra.mxu0 %v673
    %v675 = vand.u32 %v49, 4294901760
    %676 = vmatpush.msra.mxu0 %v675
    %v677 = vand.u32 %v48, 4294901760
    %678 = vmatpush.msra.mxu0 %v677
    %v679 = vand.u32 %v47, 4294901760
    %680 = vmatpush.msra.mxu0 %v679
    %v681 = vand.u32 %v46, 4294901760
    %682 = vmatpush.msra.mxu0 %v681
    %v683 = vand.u32 %v45, 4294901760
    %684 = vmatpush.msra.mxu0 %v683
    %v685 = vand.u32 %v44, 4294901760
    %686 = vmatpush.msra.mxu0 %v685
    %v687 = vand.u32 %v43, 4294901760
    %688 = vmatpush.msra.mxu0 %v687
    %v689 = vand.u32 %v42, 4294901760
    %690 = vmatpush.msra.mxu0 %v689
    %v691 = vand.u32 %v41, 4294901760
    %692 = vmatpush.msra.mxu0 %v691
    %v693 = vand.u32 %v19, 4294901760
    %v694 = vsub.f32 %v19, %v693
    %v695 = vand.u32 %v694, 4294901760
    %696 = vmatmul.f32.gmra.mxu0 %v695
    %v697 = vpop.f32.mrf.mxu0
    %v698 = vadd.f32 %v654, %v697
    %v699 = vand.u32 %v22, 4294901760
    %v700 = vsub.f32 %v22, %v699
    %v701 = vand.u32 %v700, 4294901760
    %702 = vmatmul.f32.gmra.mxu0 %v701
    %v703 = vpop.f32.mrf.mxu0
    %v704 = vadd.f32 %v659, %v703
    %705 = vdwg.mxu0
    %v706 = vand.u32 %v56, 4294901760
    %v707 = vsub.f32 %v56, %v706
    %v708 = vand.u32 %v707, 4294901760
    %709 = vmatpush.msra.mxu0 %v708
    %v710 = vand.u32 %v55, 4294901760
    %v711 = vsub.f32 %v55, %v710
    %v712 = vand.u32 %v711, 4294901760
    %713 = vmatpush.msra.mxu0 %v712
    %v714 = vand.u32 %v54, 4294901760
    %v715 = vsub.f32 %v54, %v714
    %v716 = vand.u32 %v715, 4294901760
    %717 = vmatpush.msra.mxu0 %v716
    %v718 = vand.u32 %v53, 4294901760
    %v719 = vsub.f32 %v53, %v718
    %v720 = vand.u32 %v719, 4294901760
    %721 = vmatpush.msra.mxu0 %v720
    %v722 = vand.u32 %v52, 4294901760
    %v723 = vsub.f32 %v52, %v722
    %v724 = vand.u32 %v723, 4294901760
    %725 = vmatpush.msra.mxu0 %v724
    %v726 = vand.u32 %v51, 4294901760
    %v727 = vsub.f32 %v51, %v726
    %v728 = vand.u32 %v727, 4294901760
    %729 = vmatpush.msra.mxu0 %v728
    %v730 = vand.u32 %v50, 4294901760
    %v731 = vsub.f32 %v50, %v730
    %v732 = vand.u32 %v731, 4294901760
    %733 = vmatpush.msra.mxu0 %v732
    %v734 = vand.u32 %v49, 4294901760
    %v735 = vsub.f32 %v49, %v734
    %v736 = vand.u32 %v735, 4294901760
    %737 = vmatpush.msra.mxu0 %v736
    %v738 = vand.u32 %v48, 4294901760
    %v739 = vsub.f32 %v48, %v738
    %v740 = vand.u32 %v739, 4294901760
    %741 = vmatpush.msra.mxu0 %v740
    %v742 = vand.u32 %v47, 4294901760
    %v743 = vsub.f32 %v47, %v742
    %v744 = vand.u32 %v743, 4294901760
    %745 = vmatpush.msra.mxu0 %v744
    %v746 = vand.u32 %v46, 4294901760
    %v747 = vsub.f32 %v46, %v746
    %v748 = vand.u32 %v747, 4294901760
    %749 = vmatpush.msra.mxu0 %v748
    %v750 = vand.u32 %v45, 4294901760
    %v751 = vsub.f32 %v45, %v750
    %v752 = vand.u32 %v751, 4294901760
    %753 = vmatpush.msra.mxu0 %v752
    %v754 = vand.u32 %v44, 4294901760
    %v755 = vsub.f32 %v44, %v754
    %v756 = vand.u32 %v755, 4294901760
    %757 = vmatpush.msra.mxu0 %v756
    %v758 = vand.u32 %v43, 4294901760
    %v759 = vsub.f32 %v43, %v758
    %v760 = vand.u32 %v759, 4294901760
    %761 = vmatpush.msra.mxu0 %v760
    %v762 = vand.u32 %v42, 4294901760
    %v763 = vsub.f32 %v42, %v762
    %v764 = vand.u32 %v763, 4294901760
    %765 = vmatpush.msra.mxu0 %v764
    %v766 = vand.u32 %v41, 4294901760
    %v767 = vsub.f32 %v41, %v766
    %v768 = vand.u32 %v767, 4294901760
    %769 = vmatpush.msra.mxu0 %v768
    %v770 = vand.u32 %v19, 4294901760
    %771 = vmatmul.f32.gmra.mxu0 %v770
    %v772 = vpop.f32.mrf.mxu0
    %v773 = vadd.f32 %v698, %v772
    %v774 = vand.u32 %v22, 4294901760
    %775 = vmatmul.f32.gmra.mxu0 %v774
    %v776 = vpop.f32.mrf.mxu0
    %v777 = vadd.f32 %v704, %v776
    %778 = vdwg.mxu0
    %v779 = vand.u32 %v56, 4294901760
    %780 = vmatpush.msra.mxu0 %v779
    %v781 = vand.u32 %v55, 4294901760
    %782 = vmatpush.msra.mxu0 %v781
    %v783 = vand.u32 %v54, 4294901760
    %784 = vmatpush.msra.mxu0 %v783
    %v785 = vand.u32 %v53, 4294901760
    %786 = vmatpush.msra.mxu0 %v785
    %v787 = vand.u32 %v52, 4294901760
    %788 = vmatpush.msra.mxu0 %v787
    %v789 = vand.u32 %v51, 4294901760
    %790 = vmatpush.msra.mxu0 %v789
    %v791 = vand.u32 %v50, 4294901760
    %792 = vmatpush.msra.mxu0 %v791
    %v793 = vand.u32 %v49, 4294901760
    %794 = vmatpush.msra.mxu0 %v793
    %v795 = vand.u32 %v48, 4294901760
    %796 = vmatpush.msra.mxu0 %v795
    %v797 = vand.u32 %v47, 4294901760
    %798 = vmatpush.msra.mxu0 %v797
    %v799 = vand.u32 %v46, 4294901760
    %800 = vmatpush.msra.mxu0 %v799
    %v801 = vand.u32 %v45, 4294901760
    %802 = vmatpush.msra.mxu0 %v801
    %v803 = vand.u32 %v44, 4294901760
    %804 = vmatpush.msra.mxu0 %v803
    %v805 = vand.u32 %v43, 4294901760
    %806 = vmatpush.msra.mxu0 %v805
    %v807 = vand.u32 %v42, 4294901760
    %808 = vmatpush.msra.mxu0 %v807
    %v809 = vand.u32 %v41, 4294901760
    %810 = vmatpush.msra.mxu0 %v809
    %v811 = vand.u32 %v19, 4294901760
    %812 = vmatmul.f32.gmra.mxu0 %v811
    %v813 = vpop.f32.mrf.mxu0
    %v814 = vadd.f32 %v773, %v813
    %v815 = vand.u32 %v22, 4294901760
    %816 = vmatmul.f32.gmra.mxu0 %v815
    %v817 = vpop.f32.mrf.mxu0
    %v818 = vadd.f32 %v777, %v817
    %819 = vdwg.mxu0
    %v820 = vand.u32 %v72, 4294901760
    %821 = vmatpush.msra.mxu0 %v820
    %v822 = vand.u32 %v71, 4294901760
    %823 = vmatpush.msra.mxu0 %v822
    %v824 = vand.u32 %v70, 4294901760
    %825 = vmatpush.msra.mxu0 %v824
    %v826 = vand.u32 %v69, 4294901760
    %827 = vmatpush.msra.mxu0 %v826
    %v828 = vand.u32 %v68, 4294901760
    %829 = vmatpush.msra.mxu0 %v828
    %v830 = vand.u32 %v67, 4294901760
    %831 = vmatpush.msra.mxu0 %v830
    %v832 = vand.u32 %v66, 4294901760
    %833 = vmatpush.msra.mxu0 %v832
    %v834 = vand.u32 %v65, 4294901760
    %835 = vmatpush.msra.mxu0 %v834
    %v836 = vand.u32 %v64, 4294901760
    %837 = vmatpush.msra.mxu0 %v836
    %v838 = vand.u32 %v63, 4294901760
    %839 = vmatpush.msra.mxu0 %v838
    %v840 = vand.u32 %v62, 4294901760
    %841 = vmatpush.msra.mxu0 %v840
    %v842 = vand.u32 %v61, 4294901760
    %843 = vmatpush.msra.mxu0 %v842
    %v844 = vand.u32 %v60, 4294901760
    %845 = vmatpush.msra.mxu0 %v844
    %v846 = vand.u32 %v59, 4294901760
    %847 = vmatpush.msra.mxu0 %v846
    %v848 = vand.u32 %v58, 4294901760
    %849 = vmatpush.msra.mxu0 %v848
    %v850 = vand.u32 %v57, 4294901760
    %851 = vmatpush.msra.mxu0 %v850
    %v852 = vand.u32 %v20, 4294901760
    %v853 = vsub.f32 %v20, %v852
    %v854 = vand.u32 %v853, 4294901760
    %v855 = vsub.f32 %v853, %v854
    %v856 = vand.u32 %v855, 4294901760
    %857 = vmatmul.f32.gmra.mxu0 %v856
    %v858 = vpop.f32.mrf.mxu0
    %v859 = vadd.f32 %v814, %v858
    %v860 = vand.u32 %v23, 4294901760
    %v861 = vsub.f32 %v23, %v860
    %v862 = vand.u32 %v861, 4294901760
    %v863 = vsub.f32 %v861, %v862
    %v864 = vand.u32 %v863, 4294901760
    %865 = vmatmul.f32.gmra.mxu0 %v864
    %v866 = vpop.f32.mrf.mxu0
    %v867 = vadd.f32 %v818, %v866
    %868 = vdwg.mxu0
    %v869 = vand.u32 %v72, 4294901760
    %v870 = vsub.f32 %v72, %v869
    %v871 = vand.u32 %v870, 4294901760
    %v872 = vsub.f32 %v870, %v871
    %v873 = vand.u32 %v872, 4294901760
    %874 = vmatpush.msra.mxu0 %v873
    %v875 = vand.u32 %v71, 4294901760
    %v876 = vsub.f32 %v71, %v875
    %v877 = vand.u32 %v876, 4294901760
    %v878 = vsub.f32 %v876, %v877
    %v879 = vand.u32 %v878, 4294901760
    %880 = vmatpush.msra.mxu0 %v879
    %v881 = vand.u32 %v70, 4294901760
    %v882 = vsub.f32 %v70, %v881
    %v883 = vand.u32 %v882, 4294901760
    %v884 = vsub.f32 %v882, %v883
    %v885 = vand.u32 %v884, 4294901760
    %886 = vmatpush.msra.mxu0 %v885
    %v887 = vand.u32 %v69, 4294901760
    %v888 = vsub.f32 %v69, %v887
    %v889 = vand.u32 %v888, 4294901760
    %v890 = vsub.f32 %v888, %v889
    %v891 = vand.u32 %v890, 4294901760
    %892 = vmatpush.msra.mxu0 %v891
    %v893 = vand.u32 %v68, 4294901760
    %v894 = vsub.f32 %v68, %v893
    %v895 = vand.u32 %v894, 4294901760
    %v896 = vsub.f32 %v894, %v895
    %v897 = vand.u32 %v896, 4294901760
    %898 = vmatpush.msra.mxu0 %v897
    %v899 = vand.u32 %v67, 4294901760
    %v900 = vsub.f32 %v67, %v899
    %v901 = vand.u32 %v900, 4294901760
    %v902 = vsub.f32 %v900, %v901
    %v903 = vand.u32 %v902, 4294901760
    %904 = vmatpush.msra.mxu0 %v903
    %v905 = vand.u32 %v66, 4294901760
    %v906 = vsub.f32 %v66, %v905
    %v907 = vand.u32 %v906, 4294901760
    %v908 = vsub.f32 %v906, %v907
    %v909 = vand.u32 %v908, 4294901760
    %910 = vmatpush.msra.mxu0 %v909
    %v911 = vand.u32 %v65, 4294901760
    %v912 = vsub.f32 %v65, %v911
    %v913 = vand.u32 %v912, 4294901760
    %v914 = vsub.f32 %v912, %v913
    %v915 = vand.u32 %v914, 4294901760
    %916 = vmatpush.msra.mxu0 %v915
    %v917 = vand.u32 %v64, 4294901760
    %v918 = vsub.f32 %v64, %v917
    %v919 = vand.u32 %v918, 4294901760
    %v920 = vsub.f32 %v918, %v919
    %v921 = vand.u32 %v920, 4294901760
    %922 = vmatpush.msra.mxu0 %v921
    %v923 = vand.u32 %v63, 4294901760
    %v924 = vsub.f32 %v63, %v923
    %v925 = vand.u32 %v924, 4294901760
    %v926 = vsub.f32 %v924, %v925
    %v927 = vand.u32 %v926, 4294901760
    %928 = vmatpush.msra.mxu0 %v927
    %v929 = vand.u32 %v62, 4294901760
    %v930 = vsub.f32 %v62, %v929
    %v931 = vand.u32 %v930, 4294901760
    %v932 = vsub.f32 %v930, %v931
    %v933 = vand.u32 %v932, 4294901760
    %934 = vmatpush.msra.mxu0 %v933
    %v935 = vand.u32 %v61, 4294901760
    %v936 = vsub.f32 %v61, %v935
    %v937 = vand.u32 %v936, 4294901760
    %v938 = vsub.f32 %v936, %v937
    %v939 = vand.u32 %v938, 4294901760
    %940 = vmatpush.msra.mxu0 %v939
    %v941 = vand.u32 %v60, 4294901760
    %v942 = vsub.f32 %v60, %v941
    %v943 = vand.u32 %v942, 4294901760
    %v944 = vsub.f32 %v942, %v943
    %v945 = vand.u32 %v944, 4294901760
    %946 = vmatpush.msra.mxu0 %v945
    %v947 = vand.u32 %v59, 4294901760
    %v948 = vsub.f32 %v59, %v947
    %v949 = vand.u32 %v948, 4294901760
    %v950 = vsub.f32 %v948, %v949
    %v951 = vand.u32 %v950, 4294901760
    %952 = vmatpush.msra.mxu0 %v951
    %v953 = vand.u32 %v58, 4294901760
    %v954 = vsub.f32 %v58, %v953
    %v955 = vand.u32 %v954, 4294901760
    %v956 = vsub.f32 %v954, %v955
    %v957 = vand.u32 %v956, 4294901760
    %958 = vmatpush.msra.mxu0 %v957
    %v959 = vand.u32 %v57, 4294901760
    %v960 = vsub.f32 %v57, %v959
    %v961 = vand.u32 %v960, 4294901760
    %v962 = vsub.f32 %v960, %v961
    %v963 = vand.u32 %v962, 4294901760
    %964 = vmatpush.msra.mxu0 %v963
    %v965 = vand.u32 %v20, 4294901760
    %966 = vmatmul.f32.gmra.mxu0 %v965
    %v967 = vpop.f32.mrf.mxu0
    %v968 = vadd.f32 %v859, %v967
    %v969 = vand.u32 %v23, 4294901760
    %970 = vmatmul.f32.gmra.mxu0 %v969
    %v971 = vpop.f32.mrf.mxu0
    %v972 = vadd.f32 %v867, %v971
    %973 = vdwg.mxu0
    %v974 = vand.u32 %v72, 4294901760
    %v975 = vsub.f32 %v72, %v974
    %976 = vmatpush.msra.mxu0 %v975
    %v977 = vand.u32 %v71, 4294901760
    %v978 = vsub.f32 %v71, %v977
    %979 = vmatpush.msra.mxu0 %v978
    %v980 = vand.u32 %v70, 4294901760
    %v981 = vsub.f32 %v70, %v980
    %982 = vmatpush.msra.mxu0 %v981
    %v983 = vand.u32 %v69, 4294901760
    %v984 = vsub.f32 %v69, %v983
    %985 = vmatpush.msra.mxu0 %v984
    %v986 = vand.u32 %v68, 4294901760
    %v987 = vsub.f32 %v68, %v986
    %988 = vmatpush.msra.mxu0 %v987
    %v989 = vand.u32 %v67, 4294901760
    %v990 = vsub.f32 %v67, %v989
    %991 = vmatpush.msra.mxu0 %v990
    %v992 = vand.u32 %v66, 4294901760
    %v993 = vsub.f32 %v66, %v992
    %994 = vmatpush.msra.mxu0 %v993
    %v995 = vand.u32 %v65, 4294901760
    %v996 = vsub.f32 %v65, %v995
    %997 = vmatpush.msra.mxu0 %v996
    %v998 = vand.u32 %v64, 4294901760
    %v999 = vsub.f32 %v64, %v998
    %1000 = vmatpush.msra.mxu0 %v999
    %v1001 = vand.u32 %v63, 4294901760
    %v1002 = vsub.f32 %v63, %v1001
    %1003 = vmatpush.msra.mxu0 %v1002
    %v1004 = vand.u32 %v62, 4294901760
    %v1005 = vsub.f32 %v62, %v1004
    %1006 = vmatpush.msra.mxu0 %v1005
    %v1007 = vand.u32 %v61, 4294901760
    %v1008 = vsub.f32 %v61, %v1007
    %1009 = vmatpush.msra.mxu0 %v1008
    %v1010 = vand.u32 %v60, 4294901760
    %v1011 = vsub.f32 %v60, %v1010
    %1012 = vmatpush.msra.mxu0 %v1011
    %v1013 = vand.u32 %v59, 4294901760
    %v1014 = vsub.f32 %v59, %v1013
    %1015 = vmatpush.msra.mxu0 %v1014
    %v1016 = vand.u32 %v58, 4294901760
    %v1017 = vsub.f32 %v58, %v1016
    %1018 = vmatpush.msra.mxu0 %v1017
    %v1019 = vand.u32 %v57, 4294901760
    %v1020 = vsub.f32 %v57, %v1019
    %1021 = vmatpush.msra.mxu0 %v1020
    %v1022 = vand.u32 %v20, 4294901760
    %v1023 = vsub.f32 %v20, %v1022
    %1024 = vmatmul.f32.gmra.mxu0 %v1023
    %v1025 = vpop.f32.mrf.mxu0
    %v1026 = vadd.f32 %v968, %v1025
    %v1027 = vand.u32 %v23, 4294901760
    %v1028 = vsub.f32 %v23, %v1027
    %1029 = vmatmul.f32.gmra.mxu0 %v1028
    %v1030 = vpop.f32.mrf.mxu0
    %v1031 = vadd.f32 %v972, %v1030
    %1032 = vdwg.mxu0
    %v1033 = vand.u32 %v72, 4294901760
    %1034 = vmatpush.msra.mxu0 %v1033
    %v1035 = vand.u32 %v71, 4294901760
    %1036 = vmatpush.msra.mxu0 %v1035
    %v1037 = vand.u32 %v70, 4294901760
    %1038 = vmatpush.msra.mxu0 %v1037
    %v1039 = vand.u32 %v69, 4294901760
    %1040 = vmatpush.msra.mxu0 %v1039
    %v1041 = vand.u32 %v68, 4294901760
    %1042 = vmatpush.msra.mxu0 %v1041
    %v1043 = vand.u32 %v67, 4294901760
    %1044 = vmatpush.msra.mxu0 %v1043
    %v1045 = vand.u32 %v66, 4294901760
    %1046 = vmatpush.msra.mxu0 %v1045
    %v1047 = vand.u32 %v65, 4294901760
    %1048 = vmatpush.msra.mxu0 %v1047
    %v1049 = vand.u32 %v64, 4294901760
    %1050 = vmatpush.msra.mxu0 %v1049
    %v1051 = vand.u32 %v63, 4294901760
    %1052 = vmatpush.msra.mxu0 %v1051
    %v1053 = vand.u32 %v62, 4294901760
    %1054 = vmatpush.msra.mxu0 %v1053
    %v1055 = vand.u32 %v61, 4294901760
    %1056 = vmatpush.msra.mxu0 %v1055
    %v1057 = vand.u32 %v60, 4294901760
    %1058 = vmatpush.msra.mxu0 %v1057
    %v1059 = vand.u32 %v59, 4294901760
    %1060 = vmatpush.msra.mxu0 %v1059
    %v1061 = vand.u32 %v58, 4294901760
    %1062 = vmatpush.msra.mxu0 %v1061
    %v1063 = vand.u32 %v57, 4294901760
    %1064 = vmatpush.msra.mxu0 %v1063
    %v1065 = vand.u32 %v20, 4294901760
    %v1066 = vsub.f32 %v20, %v1065
    %v1067 = vand.u32 %v1066, 4294901760
    %1068 = vmatmul.f32.gmra.mxu0 %v1067
    %v1069 = vpop.f32.mrf.mxu0
    %v1070 = vadd.f32 %v1026, %v1069
    %v1071 = vand.u32 %v23, 4294901760
    %v1072 = vsub.f32 %v23, %v1071
    %v1073 = vand.u32 %v1072, 4294901760
    %1074 = vmatmul.f32.gmra.mxu0 %v1073
    %v1075 = vpop.f32.mrf.mxu0
    %v1076 = vadd.f32 %v1031, %v1075
    %1077 = vdwg.mxu0
    %v1078 = vand.u32 %v72, 4294901760
    %v1079 = vsub.f32 %v72, %v1078
    %v1080 = vand.u32 %v1079, 4294901760
    %1081 = vmatpush.msra.mxu0 %v1080
    %v1082 = vand.u32 %v71, 4294901760
    %v1083 = vsub.f32 %v71, %v1082
    %v1084 = vand.u32 %v1083, 4294901760
    %1085 = vmatpush.msra.mxu0 %v1084
    %v1086 = vand.u32 %v70, 4294901760
    %v1087 = vsub.f32 %v70, %v1086
    %v1088 = vand.u32 %v1087, 4294901760
    %1089 = vmatpush.msra.mxu0 %v1088
    %v1090 = vand.u32 %v69, 4294901760
    %v1091 = vsub.f32 %v69, %v1090
    %v1092 = vand.u32 %v1091, 4294901760
    %1093 = vmatpush.msra.mxu0 %v1092
    %v1094 = vand.u32 %v68, 4294901760
    %v1095 = vsub.f32 %v68, %v1094
    %v1096 = vand.u32 %v1095, 4294901760
    %1097 = vmatpush.msra.mxu0 %v1096
    %v1098 = vand.u32 %v67, 4294901760
    %v1099 = vsub.f32 %v67, %v1098
    %v1100 = vand.u32 %v1099, 4294901760
    %1101 = vmatpush.msra.mxu0 %v1100
    %v1102 = vand.u32 %v66, 4294901760
    %v1103 = vsub.f32 %v66, %v1102
    %v1104 = vand.u32 %v1103, 4294901760
    %1105 = vmatpush.msra.mxu0 %v1104
    %v1106 = vand.u32 %v65, 4294901760
    %v1107 = vsub.f32 %v65, %v1106
    %v1108 = vand.u32 %v1107, 4294901760
    %1109 = vmatpush.msra.mxu0 %v1108
    %v1110 = vand.u32 %v64, 4294901760
    %v1111 = vsub.f32 %v64, %v1110
    %v1112 = vand.u32 %v1111, 4294901760
    %1113 = vmatpush.msra.mxu0 %v1112
    %v1114 = vand.u32 %v63, 4294901760
    %v1115 = vsub.f32 %v63, %v1114
    %v1116 = vand.u32 %v1115, 4294901760
    %1117 = vmatpush.msra.mxu0 %v1116
    %v1118 = vand.u32 %v62, 4294901760
    %v1119 = vsub.f32 %v62, %v1118
    %v1120 = vand.u32 %v1119, 4294901760
    %1121 = vmatpush.msra.mxu0 %v1120
    %v1122 = vand.u32 %v61, 4294901760
    %v1123 = vsub.f32 %v61, %v1122
    %v1124 = vand.u32 %v1123, 4294901760
    %1125 = vmatpush.msra.mxu0 %v1124
    %v1126 = vand.u32 %v60, 4294901760
    %v1127 = vsub.f32 %v60, %v1126
    %v1128 = vand.u32 %v1127, 4294901760
    %1129 = vmatpush.msra.mxu0 %v1128
    %v1130 = vand.u32 %v59, 4294901760
    %v1131 = vsub.f32 %v59, %v1130
    %v1132 = vand.u32 %v1131, 4294901760
    %1133 = vmatpush.msra.mxu0 %v1132
    %v1134 = vand.u32 %v58, 4294901760
    %v1135 = vsub.f32 %v58, %v1134
    %v1136 = vand.u32 %v1135, 4294901760
    %1137 = vmatpush.msra.mxu0 %v1136
    %v1138 = vand.u32 %v57, 4294901760
    %v1139 = vsub.f32 %v57, %v1138
    %v1140 = vand.u32 %v1139, 4294901760
    %1141 = vmatpush.msra.mxu0 %v1140
    %v1142 = vand.u32 %v20, 4294901760
    %1143 = vmatmul.f32.gmra.mxu0 %v1142
    %v1144 = vpop.f32.mrf.mxu0
    %v1145 = vadd.f32 %v1070, %v1144
    %v1146 = vand.u32 %v23, 4294901760
    %1147 = vmatmul.f32.gmra.mxu0 %v1146
    %v1148 = vpop.f32.mrf.mxu0
    %v1149 = vadd.f32 %v1076, %v1148
    %1150 = vdwg.mxu0
    %v1151 = vand.u32 %v72, 4294901760
    %1152 = vmatpush.msra.mxu0 %v1151
    %v1153 = vand.u32 %v71, 4294901760
    %1154 = vmatpush.msra.mxu0 %v1153
    %v1155 = vand.u32 %v70, 4294901760
    %1156 = vmatpush.msra.mxu0 %v1155
    %v1157 = vand.u32 %v69, 4294901760
    %1158 = vmatpush.msra.mxu0 %v1157
    %v1159 = vand.u32 %v68, 4294901760
    %1160 = vmatpush.msra.mxu0 %v1159
    %v1161 = vand.u32 %v67, 4294901760
    %1162 = vmatpush.msra.mxu0 %v1161
    %v1163 = vand.u32 %v66, 4294901760
    %1164 = vmatpush.msra.mxu0 %v1163
    %v1165 = vand.u32 %v65, 4294901760
    %1166 = vmatpush.msra.mxu0 %v1165
    %v1167 = vand.u32 %v64, 4294901760
    %1168 = vmatpush.msra.mxu0 %v1167
    %v1169 = vand.u32 %v63, 4294901760
    %1170 = vmatpush.msra.mxu0 %v1169
    %v1171 = vand.u32 %v62, 4294901760
    %1172 = vmatpush.msra.mxu0 %v1171
    %v1173 = vand.u32 %v61, 4294901760
    %1174 = vmatpush.msra.mxu0 %v1173
    %v1175 = vand.u32 %v60, 4294901760
    %1176 = vmatpush.msra.mxu0 %v1175
    %v1177 = vand.u32 %v59, 4294901760
    %1178 = vmatpush.msra.mxu0 %v1177
    %v1179 = vand.u32 %v58, 4294901760
    %1180 = vmatpush.msra.mxu0 %v1179
    %v1181 = vand.u32 %v57, 4294901760
    %1182 = vmatpush.msra.mxu0 %v1181
    %v1183 = vand.u32 %v20, 4294901760
    %1184 = vmatmul.f32.gmra.mxu0 %v1183
    %v1185 = vpop.f32.mrf.mxu0
    %v1186 = vadd.f32 %v1145, %v1185
    %v1187 = vand.u32 %v23, 4294901760
    %1188 = vmatmul.f32.gmra.mxu0 %v1187
    %v1189 = vpop.f32.mrf.mxu0
    %v1190 = vadd.f32 %v1149, %v1189
    %1191 = vdwg.mxu0
    %v1192 = vmul.f32 %v18, %v18
    %v1193 = vmul.f32 %v19, %v19
    %v1194 = vmul.f32 %v20, %v20
    %v1195 = vmul.f32 %v21, %v21
    %v1196 = vmul.f32 %v22, %v22
    %v1197 = vmul.f32 %v23, %v23
    %v1198 = vand.u32 %v40, 4294901760
    %1199 = vmatpush.msra.mxu0 %v1198
    %v1200 = vand.u32 %v39, 4294901760
    %1201 = vmatpush.msra.mxu0 %v1200
    %v1202 = vand.u32 %v38, 4294901760
    %1203 = vmatpush.msra.mxu0 %v1202
    %v1204 = vand.u32 %v37, 4294901760
    %1205 = vmatpush.msra.mxu0 %v1204
    %v1206 = vand.u32 %v36, 4294901760
    %1207 = vmatpush.msra.mxu0 %v1206
    %v1208 = vand.u32 %v35, 4294901760
    %1209 = vmatpush.msra.mxu0 %v1208
    %v1210 = vand.u32 %v34, 4294901760
    %1211 = vmatpush.msra.mxu0 %v1210
    %v1212 = vand.u32 %v33, 4294901760
    %1213 = vmatpush.msra.mxu0 %v1212
    %v1214 = vand.u32 %v32, 4294901760
    %1215 = vmatpush.msra.mxu0 %v1214
    %v1216 = vand.u32 %v31, 4294901760
    %1217 = vmatpush.msra.mxu0 %v1216
    %v1218 = vand.u32 %v30, 4294901760
    %1219 = vmatpush.msra.mxu0 %v1218
    %v1220 = vand.u32 %v29, 4294901760
    %1221 = vmatpush.msra.mxu0 %v1220
    %v1222 = vand.u32 %v28, 4294901760
    %1223 = vmatpush.msra.mxu0 %v1222
    %v1224 = vand.u32 %v27, 4294901760
    %1225 = vmatpush.msra.mxu0 %v1224
    %v1226 = vand.u32 %v26, 4294901760
    %1227 = vmatpush.msra.mxu0 %v1226
    %v1228 = vand.u32 %v25, 4294901760
    %1229 = vmatpush.msra.mxu0 %v1228
    %v1230 = vand.u32 %v1192, 4294901760
    %v1231 = vsub.f32 %v1192, %v1230
    %v1232 = vand.u32 %v1231, 4294901760
    %v1233 = vsub.f32 %v1231, %v1232
    %v1234 = vand.u32 %v1233, 4294901760
    %1235 = vmatmul.f32.gmra.mxu0 %v1234
    %v1236 = vpop.f32.mrf.mxu0
    %v1237 = vadd.f32 0.0, %v1236
    %v1238 = vand.u32 %v1195, 4294901760
    %v1239 = vsub.f32 %v1195, %v1238
    %v1240 = vand.u32 %v1239, 4294901760
    %v1241 = vsub.f32 %v1239, %v1240
    %v1242 = vand.u32 %v1241, 4294901760
    %1243 = vmatmul.f32.gmra.mxu0 %v1242
    %v1244 = vpop.f32.mrf.mxu0
    %v1245 = vadd.f32 0.0, %v1244
    %1246 = vdwg.mxu0
    %v1247 = vand.u32 %v40, 4294901760
    %v1248 = vsub.f32 %v40, %v1247
    %v1249 = vand.u32 %v1248, 4294901760
    %v1250 = vsub.f32 %v1248, %v1249
    %v1251 = vand.u32 %v1250, 4294901760
    %1252 = vmatpush.msra.mxu0 %v1251
    %v1253 = vand.u32 %v39, 4294901760
    %v1254 = vsub.f32 %v39, %v1253
    %v1255 = vand.u32 %v1254, 4294901760
    %v1256 = vsub.f32 %v1254, %v1255
    %v1257 = vand.u32 %v1256, 4294901760
    %1258 = vmatpush.msra.mxu0 %v1257
    %v1259 = vand.u32 %v38, 4294901760
    %v1260 = vsub.f32 %v38, %v1259
    %v1261 = vand.u32 %v1260, 4294901760
    %v1262 = vsub.f32 %v1260, %v1261
    %v1263 = vand.u32 %v1262, 4294901760
    %1264 = vmatpush.msra.mxu0 %v1263
    %v1265 = vand.u32 %v37, 4294901760
    %v1266 = vsub.f32 %v37, %v1265
    %v1267 = vand.u32 %v1266, 4294901760
    %v1268 = vsub.f32 %v1266, %v1267
    %v1269 = vand.u32 %v1268, 4294901760
    %1270 = vmatpush.msra.mxu0 %v1269
    %v1271 = vand.u32 %v36, 4294901760
    %v1272 = vsub.f32 %v36, %v1271
    %v1273 = vand.u32 %v1272, 4294901760
    %v1274 = vsub.f32 %v1272, %v1273
    %v1275 = vand.u32 %v1274, 4294901760
    %1276 = vmatpush.msra.mxu0 %v1275
    %v1277 = vand.u32 %v35, 4294901760
    %v1278 = vsub.f32 %v35, %v1277
    %v1279 = vand.u32 %v1278, 4294901760
    %v1280 = vsub.f32 %v1278, %v1279
    %v1281 = vand.u32 %v1280, 4294901760
    %1282 = vmatpush.msra.mxu0 %v1281
    %v1283 = vand.u32 %v34, 4294901760
    %v1284 = vsub.f32 %v34, %v1283
    %v1285 = vand.u32 %v1284, 4294901760
    %v1286 = vsub.f32 %v1284, %v1285
    %v1287 = vand.u32 %v1286, 4294901760
    %1288 = vmatpush.msra.mxu0 %v1287
    %v1289 = vand.u32 %v33, 4294901760
    %v1290 = vsub.f32 %v33, %v1289
    %v1291 = vand.u32 %v1290, 4294901760
    %v1292 = vsub.f32 %v1290, %v1291
    %v1293 = vand.u32 %v1292, 4294901760
    %1294 = vmatpush.msra.mxu0 %v1293
    %v1295 = vand.u32 %v32, 4294901760
    %v1296 = vsub.f32 %v32, %v1295
    %v1297 = vand.u32 %v1296, 4294901760
    %v1298 = vsub.f32 %v1296, %v1297
    %v1299 = vand.u32 %v1298, 4294901760
    %1300 = vmatpush.msra.mxu0 %v1299
    %v1301 = vand.u32 %v31, 4294901760
    %v1302 = vsub.f32 %v31, %v1301
    %v1303 = vand.u32 %v1302, 4294901760
    %v1304 = vsub.f32 %v1302, %v1303
    %v1305 = vand.u32 %v1304, 4294901760
    %1306 = vmatpush.msra.mxu0 %v1305
    %v1307 = vand.u32 %v30, 4294901760
    %v1308 = vsub.f32 %v30, %v1307
    %v1309 = vand.u32 %v1308, 4294901760
    %v1310 = vsub.f32 %v1308, %v1309
    %v1311 = vand.u32 %v1310, 4294901760
    %1312 = vmatpush.msra.mxu0 %v1311
    %v1313 = vand.u32 %v29, 4294901760
    %v1314 = vsub.f32 %v29, %v1313
    %v1315 = vand.u32 %v1314, 4294901760
    %v1316 = vsub.f32 %v1314, %v1315
    %v1317 = vand.u32 %v1316, 4294901760
    %1318 = vmatpush.msra.mxu0 %v1317
    %v1319 = vand.u32 %v28, 4294901760
    %v1320 = vsub.f32 %v28, %v1319
    %v1321 = vand.u32 %v1320, 4294901760
    %v1322 = vsub.f32 %v1320, %v1321
    %v1323 = vand.u32 %v1322, 4294901760
    %1324 = vmatpush.msra.mxu0 %v1323
    %v1325 = vand.u32 %v27, 4294901760
    %v1326 = vsub.f32 %v27, %v1325
    %v1327 = vand.u32 %v1326, 4294901760
    %v1328 = vsub.f32 %v1326, %v1327
    %v1329 = vand.u32 %v1328, 4294901760
    %1330 = vmatpush.msra.mxu0 %v1329
    %v1331 = vand.u32 %v26, 4294901760
    %v1332 = vsub.f32 %v26, %v1331
    %v1333 = vand.u32 %v1332, 4294901760
    %v1334 = vsub.f32 %v1332, %v1333
    %v1335 = vand.u32 %v1334, 4294901760
    %1336 = vmatpush.msra.mxu0 %v1335
    %v1337 = vand.u32 %v25, 4294901760
    %v1338 = vsub.f32 %v25, %v1337
    %v1339 = vand.u32 %v1338, 4294901760
    %v1340 = vsub.f32 %v1338, %v1339
    %v1341 = vand.u32 %v1340, 4294901760
    %1342 = vmatpush.msra.mxu0 %v1341
    %v1343 = vand.u32 %v1192, 4294901760
    %1344 = vmatmul.f32.gmra.mxu0 %v1343
    %v1345 = vpop.f32.mrf.mxu0
    %v1346 = vadd.f32 %v1237, %v1345
    %v1347 = vand.u32 %v1195, 4294901760
    %1348 = vmatmul.f32.gmra.mxu0 %v1347
    %v1349 = vpop.f32.mrf.mxu0
    %v1350 = vadd.f32 %v1245, %v1349
    %1351 = vdwg.mxu0
    %v1352 = vand.u32 %v40, 4294901760
    %v1353 = vsub.f32 %v40, %v1352
    %1354 = vmatpush.msra.mxu0 %v1353
    %v1355 = vand.u32 %v39, 4294901760
    %v1356 = vsub.f32 %v39, %v1355
    %1357 = vmatpush.msra.mxu0 %v1356
    %v1358 = vand.u32 %v38, 4294901760
    %v1359 = vsub.f32 %v38, %v1358
    %1360 = vmatpush.msra.mxu0 %v1359
    %v1361 = vand.u32 %v37, 4294901760
    %v1362 = vsub.f32 %v37, %v1361
    %1363 = vmatpush.msra.mxu0 %v1362
    %v1364 = vand.u32 %v36, 4294901760
    %v1365 = vsub.f32 %v36, %v1364
    %1366 = vmatpush.msra.mxu0 %v1365
    %v1367 = vand.u32 %v35, 4294901760
    %v1368 = vsub.f32 %v35, %v1367
    %1369 = vmatpush.msra.mxu0 %v1368
    %v1370 = vand.u32 %v34, 4294901760
    %v1371 = vsub.f32 %v34, %v1370
    %1372 = vmatpush.msra.mxu0 %v1371
    %v1373 = vand.u32 %v33, 4294901760
    %v1374 = vsub.f32 %v33, %v1373
    %1375 = vmatpush.msra.mxu0 %v1374
    %v1376 = vand.u32 %v32, 4294901760
    %v1377 = vsub.f32 %v32, %v1376
    %1378 = vmatpush.msra.mxu0 %v1377
    %v1379 = vand.u32 %v31, 4294901760
    %v1380 = vsub.f32 %v31, %v1379
    %1381 = vmatpush.msra.mxu0 %v1380
    %v1382 = vand.u32 %v30, 4294901760
    %v1383 = vsub.f32 %v30, %v1382
    %1384 = vmatpush.msra.mxu0 %v1383
    %v1385 = vand.u32 %v29, 4294901760
    %v1386 = vsub.f32 %v29, %v1385
    %1387 = vmatpush.msra.mxu0 %v1386
    %v1388 = vand.u32 %v28, 4294901760
    %v1389 = vsub.f32 %v28, %v1388
    %1390 = vmatpush.msra.mxu0 %v1389
    %v1391 = vand.u32 %v27, 4294901760
    %v1392 = vsub.f32 %v27, %v1391
    %1393 = vmatpush.msra.mxu0 %v1392
    %v1394 = vand.u32 %v26, 4294901760
    %v1395 = vsub.f32 %v26, %v1394
    %1396 = vmatpush.msra.mxu0 %v1395
    %v1397 = vand.u32 %v25, 4294901760
    %v1398 = vsub.f32 %v25, %v1397
    %1399 = vmatpush.msra.mxu0 %v1398
    %v1400 = vand.u32 %v1192, 4294901760
    %v1401 = vsub.f32 %v1192, %v1400
    %1402 = vmatmul.f32.gmra.mxu0 %v1401
    %v1403 = vpop.f32.mrf.mxu0
    %v1404 = vadd.f32 %v1346, %v1403
    %v1405 = vand.u32 %v1195, 4294901760
    %v1406 = vsub.f32 %v1195, %v1405
    %1407 = vmatmul.f32.gmra.mxu0 %v1406
    %v1408 = vpop.f32.mrf.mxu0
    %v1409 = vadd.f32 %v1350, %v1408
    %1410 = vdwg.mxu0
    %v1411 = vand.u32 %v40, 4294901760
    %1412 = vmatpush.msra.mxu0 %v1411
    %v1413 = vand.u32 %v39, 4294901760
    %1414 = vmatpush.msra.mxu0 %v1413
    %v1415 = vand.u32 %v38, 4294901760
    %1416 = vmatpush.msra.mxu0 %v1415
    %v1417 = vand.u32 %v37, 4294901760
    %1418 = vmatpush.msra.mxu0 %v1417
    %v1419 = vand.u32 %v36, 4294901760
    %1420 = vmatpush.msra.mxu0 %v1419
    %v1421 = vand.u32 %v35, 4294901760
    %1422 = vmatpush.msra.mxu0 %v1421
    %v1423 = vand.u32 %v34, 4294901760
    %1424 = vmatpush.msra.mxu0 %v1423
    %v1425 = vand.u32 %v33, 4294901760
    %1426 = vmatpush.msra.mxu0 %v1425
    %v1427 = vand.u32 %v32, 4294901760
    %1428 = vmatpush.msra.mxu0 %v1427
    %v1429 = vand.u32 %v31, 4294901760
    %1430 = vmatpush.msra.mxu0 %v1429
    %v1431 = vand.u32 %v30, 4294901760
    %1432 = vmatpush.msra.mxu0 %v1431
    %v1433 = vand.u32 %v29, 4294901760
    %1434 = vmatpush.msra.mxu0 %v1433
    %v1435 = vand.u32 %v28, 4294901760
    %1436 = vmatpush.msra.mxu0 %v1435
    %v1437 = vand.u32 %v27, 4294901760
    %1438 = vmatpush.msra.mxu0 %v1437
    %v1439 = vand.u32 %v26, 4294901760
    %1440 = vmatpush.msra.mxu0 %v1439
    %v1441 = vand.u32 %v25, 4294901760
    %1442 = vmatpush.msra.mxu0 %v1441
    %v1443 = vand.u32 %v1192, 4294901760
    %v1444 = vsub.f32 %v1192, %v1443
    %v1445 = vand.u32 %v1444, 4294901760
    %1446 = vmatmul.f32.gmra.mxu0 %v1445
    %v1447 = vpop.f32.mrf.mxu0
    %v1448 = vadd.f32 %v1404, %v1447
    %v1449 = vand.u32 %v1195, 4294901760
    %v1450 = vsub.f32 %v1195, %v1449
    %v1451 = vand.u32 %v1450, 4294901760
    %1452 = vmatmul.f32.gmra.mxu0 %v1451
    %v1453 = vpop.f32.mrf.mxu0
    %v1454 = vadd.f32 %v1409, %v1453
    %1455 = vdwg.mxu0
    %v1456 = vand.u32 %v40, 4294901760
    %v1457 = vsub.f32 %v40, %v1456
    %v1458 = vand.u32 %v1457, 4294901760
    %1459 = vmatpush.msra.mxu0 %v1458
    %v1460 = vand.u32 %v39, 4294901760
    %v1461 = vsub.f32 %v39, %v1460
    %v1462 = vand.u32 %v1461, 4294901760
    %1463 = vmatpush.msra.mxu0 %v1462
    %v1464 = vand.u32 %v38, 4294901760
    %v1465 = vsub.f32 %v38, %v1464
    %v1466 = vand.u32 %v1465, 4294901760
    %1467 = vmatpush.msra.mxu0 %v1466
    %v1468 = vand.u32 %v37, 4294901760
    %v1469 = vsub.f32 %v37, %v1468
    %v1470 = vand.u32 %v1469, 4294901760
    %1471 = vmatpush.msra.mxu0 %v1470
    %v1472 = vand.u32 %v36, 4294901760
    %v1473 = vsub.f32 %v36, %v1472
    %v1474 = vand.u32 %v1473, 4294901760
    %1475 = vmatpush.msra.mxu0 %v1474
    %v1476 = vand.u32 %v35, 4294901760
    %v1477 = vsub.f32 %v35, %v1476
    %v1478 = vand.u32 %v1477, 4294901760
    %1479 = vmatpush.msra.mxu0 %v1478
    %v1480 = vand.u32 %v34, 4294901760
    %v1481 = vsub.f32 %v34, %v1480
    %v1482 = vand.u32 %v1481, 4294901760
    %1483 = vmatpush.msra.mxu0 %v1482
    %v1484 = vand.u32 %v33, 4294901760
    %v1485 = vsub.f32 %v33, %v1484
    %v1486 = vand.u32 %v1485, 4294901760
    %1487 = vmatpush.msra.mxu0 %v1486
    %v1488 = vand.u32 %v32, 4294901760
    %v1489 = vsub.f32 %v32, %v1488
    %v1490 = vand.u32 %v1489, 4294901760
    %1491 = vmatpush.msra.mxu0 %v1490
    %v1492 = vand.u32 %v31, 4294901760
    %v1493 = vsub.f32 %v31, %v1492
    %v1494 = vand.u32 %v1493, 4294901760
    %1495 = vmatpush.msra.mxu0 %v1494
    %v1496 = vand.u32 %v30, 4294901760
    %v1497 = vsub.f32 %v30, %v1496
    %v1498 = vand.u32 %v1497, 4294901760
    %1499 = vmatpush.msra.mxu0 %v1498
    %v1500 = vand.u32 %v29, 4294901760
    %v1501 = vsub.f32 %v29, %v1500
    %v1502 = vand.u32 %v1501, 4294901760
    %1503 = vmatpush.msra.mxu0 %v1502
    %v1504 = vand.u32 %v28, 4294901760
    %v1505 = vsub.f32 %v28, %v1504
    %v1506 = vand.u32 %v1505, 4294901760
    %1507 = vmatpush.msra.mxu0 %v1506
    %v1508 = vand.u32 %v27, 4294901760
    %v1509 = vsub.f32 %v27, %v1508
    %v1510 = vand.u32 %v1509, 4294901760
    %1511 = vmatpush.msra.mxu0 %v1510
    %v1512 = vand.u32 %v26, 4294901760
    %v1513 = vsub.f32 %v26, %v1512
    %v1514 = vand.u32 %v1513, 4294901760
    %1515 = vmatpush.msra.mxu0 %v1514
    %v1516 = vand.u32 %v25, 4294901760
    %v1517 = vsub.f32 %v25, %v1516
    %v1518 = vand.u32 %v1517, 4294901760
    %1519 = vmatpush.msra.mxu0 %v1518
    %v1520 = vand.u32 %v1192, 4294901760
    %1521 = vmatmul.f32.gmra.mxu0 %v1520
    %v1522 = vpop.f32.mrf.mxu0
    %v1523 = vadd.f32 %v1448, %v1522
    %v1524 = vand.u32 %v1195, 4294901760
    %1525 = vmatmul.f32.gmra.mxu0 %v1524
    %v1526 = vpop.f32.mrf.mxu0
    %v1527 = vadd.f32 %v1454, %v1526
    %1528 = vdwg.mxu0
    %v1529 = vand.u32 %v40, 4294901760
    %1530 = vmatpush.msra.mxu0 %v1529
    %v1531 = vand.u32 %v39, 4294901760
    %1532 = vmatpush.msra.mxu0 %v1531
    %v1533 = vand.u32 %v38, 4294901760
    %1534 = vmatpush.msra.mxu0 %v1533
    %v1535 = vand.u32 %v37, 4294901760
    %1536 = vmatpush.msra.mxu0 %v1535
    %v1537 = vand.u32 %v36, 4294901760
    %1538 = vmatpush.msra.mxu0 %v1537
    %v1539 = vand.u32 %v35, 4294901760
    %1540 = vmatpush.msra.mxu0 %v1539
    %v1541 = vand.u32 %v34, 4294901760
    %1542 = vmatpush.msra.mxu0 %v1541
    %v1543 = vand.u32 %v33, 4294901760
    %1544 = vmatpush.msra.mxu0 %v1543
    %v1545 = vand.u32 %v32, 4294901760
    %1546 = vmatpush.msra.mxu0 %v1545
    %v1547 = vand.u32 %v31, 4294901760
    %1548 = vmatpush.msra.mxu0 %v1547
    %v1549 = vand.u32 %v30, 4294901760
    %1550 = vmatpush.msra.mxu0 %v1549
    %v1551 = vand.u32 %v29, 4294901760
    %1552 = vmatpush.msra.mxu0 %v1551
    %v1553 = vand.u32 %v28, 4294901760
    %1554 = vmatpush.msra.mxu0 %v1553
    %v1555 = vand.u32 %v27, 4294901760
    %1556 = vmatpush.msra.mxu0 %v1555
    %v1557 = vand.u32 %v26, 4294901760
    %1558 = vmatpush.msra.mxu0 %v1557
    %v1559 = vand.u32 %v25, 4294901760
    %1560 = vmatpush.msra.mxu0 %v1559
    %v1561 = vand.u32 %v1192, 4294901760
    %1562 = vmatmul.f32.gmra.mxu0 %v1561
    %v1563 = vpop.f32.mrf.mxu0
    %v1564 = vadd.f32 %v1523, %v1563
    %v1565 = vand.u32 %v1195, 4294901760
    %1566 = vmatmul.f32.gmra.mxu0 %v1565
    %v1567 = vpop.f32.mrf.mxu0
    %v1568 = vadd.f32 %v1527, %v1567
    %1569 = vdwg.mxu0
    %v1570 = vand.u32 %v56, 4294901760
    %1571 = vmatpush.msra.mxu0 %v1570
    %v1572 = vand.u32 %v55, 4294901760
    %1573 = vmatpush.msra.mxu0 %v1572
    %v1574 = vand.u32 %v54, 4294901760
    %1575 = vmatpush.msra.mxu0 %v1574
    %v1576 = vand.u32 %v53, 4294901760
    %1577 = vmatpush.msra.mxu0 %v1576
    %v1578 = vand.u32 %v52, 4294901760
    %1579 = vmatpush.msra.mxu0 %v1578
    %v1580 = vand.u32 %v51, 4294901760
    %1581 = vmatpush.msra.mxu0 %v1580
    %v1582 = vand.u32 %v50, 4294901760
    %1583 = vmatpush.msra.mxu0 %v1582
    %v1584 = vand.u32 %v49, 4294901760
    %1585 = vmatpush.msra.mxu0 %v1584
    %v1586 = vand.u32 %v48, 4294901760
    %1587 = vmatpush.msra.mxu0 %v1586
    %v1588 = vand.u32 %v47, 4294901760
    %1589 = vmatpush.msra.mxu0 %v1588
    %v1590 = vand.u32 %v46, 4294901760
    %1591 = vmatpush.msra.mxu0 %v1590
    %v1592 = vand.u32 %v45, 4294901760
    %1593 = vmatpush.msra.mxu0 %v1592
    %v1594 = vand.u32 %v44, 4294901760
    %1595 = vmatpush.msra.mxu0 %v1594
    %v1596 = vand.u32 %v43, 4294901760
    %1597 = vmatpush.msra.mxu0 %v1596
    %v1598 = vand.u32 %v42, 4294901760
    %1599 = vmatpush.msra.mxu0 %v1598
    %v1600 = vand.u32 %v41, 4294901760
    %1601 = vmatpush.msra.mxu0 %v1600
    %v1602 = vand.u32 %v1193, 4294901760
    %v1603 = vsub.f32 %v1193, %v1602
    %v1604 = vand.u32 %v1603, 4294901760
    %v1605 = vsub.f32 %v1603, %v1604
    %v1606 = vand.u32 %v1605, 4294901760
    %1607 = vmatmul.f32.gmra.mxu0 %v1606
    %v1608 = vpop.f32.mrf.mxu0
    %v1609 = vadd.f32 %v1564, %v1608
    %v1610 = vand.u32 %v1196, 4294901760
    %v1611 = vsub.f32 %v1196, %v1610
    %v1612 = vand.u32 %v1611, 4294901760
    %v1613 = vsub.f32 %v1611, %v1612
    %v1614 = vand.u32 %v1613, 4294901760
    %1615 = vmatmul.f32.gmra.mxu0 %v1614
    %v1616 = vpop.f32.mrf.mxu0
    %v1617 = vadd.f32 %v1568, %v1616
    %1618 = vdwg.mxu0
    %v1619 = vand.u32 %v56, 4294901760
    %v1620 = vsub.f32 %v56, %v1619
    %v1621 = vand.u32 %v1620, 4294901760
    %v1622 = vsub.f32 %v1620, %v1621
    %v1623 = vand.u32 %v1622, 4294901760
    %1624 = vmatpush.msra.mxu0 %v1623
    %v1625 = vand.u32 %v55, 4294901760
    %v1626 = vsub.f32 %v55, %v1625
    %v1627 = vand.u32 %v1626, 4294901760
    %v1628 = vsub.f32 %v1626, %v1627
    %v1629 = vand.u32 %v1628, 4294901760
    %1630 = vmatpush.msra.mxu0 %v1629
    %v1631 = vand.u32 %v54, 4294901760
    %v1632 = vsub.f32 %v54, %v1631
    %v1633 = vand.u32 %v1632, 4294901760
    %v1634 = vsub.f32 %v1632, %v1633
    %v1635 = vand.u32 %v1634, 4294901760
    %1636 = vmatpush.msra.mxu0 %v1635
    %v1637 = vand.u32 %v53, 4294901760
    %v1638 = vsub.f32 %v53, %v1637
    %v1639 = vand.u32 %v1638, 4294901760
    %v1640 = vsub.f32 %v1638, %v1639
    %v1641 = vand.u32 %v1640, 4294901760
    %1642 = vmatpush.msra.mxu0 %v1641
    %v1643 = vand.u32 %v52, 4294901760
    %v1644 = vsub.f32 %v52, %v1643
    %v1645 = vand.u32 %v1644, 4294901760
    %v1646 = vsub.f32 %v1644, %v1645
    %v1647 = vand.u32 %v1646, 4294901760
    %1648 = vmatpush.msra.mxu0 %v1647
    %v1649 = vand.u32 %v51, 4294901760
    %v1650 = vsub.f32 %v51, %v1649
    %v1651 = vand.u32 %v1650, 4294901760
    %v1652 = vsub.f32 %v1650, %v1651
    %v1653 = vand.u32 %v1652, 4294901760
    %1654 = vmatpush.msra.mxu0 %v1653
    %v1655 = vand.u32 %v50, 4294901760
    %v1656 = vsub.f32 %v50, %v1655
    %v1657 = vand.u32 %v1656, 4294901760
    %v1658 = vsub.f32 %v1656, %v1657
    %v1659 = vand.u32 %v1658, 4294901760
    %1660 = vmatpush.msra.mxu0 %v1659
    %v1661 = vand.u32 %v49, 4294901760
    %v1662 = vsub.f32 %v49, %v1661
    %v1663 = vand.u32 %v1662, 4294901760
    %v1664 = vsub.f32 %v1662, %v1663
    %v1665 = vand.u32 %v1664, 4294901760
    %1666 = vmatpush.msra.mxu0 %v1665
    %v1667 = vand.u32 %v48, 4294901760
    %v1668 = vsub.f32 %v48, %v1667
    %v1669 = vand.u32 %v1668, 4294901760
    %v1670 = vsub.f32 %v1668, %v1669
    %v1671 = vand.u32 %v1670, 4294901760
    %1672 = vmatpush.msra.mxu0 %v1671
    %v1673 = vand.u32 %v47, 4294901760
    %v1674 = vsub.f32 %v47, %v1673
    %v1675 = vand.u32 %v1674, 4294901760
    %v1676 = vsub.f32 %v1674, %v1675
    %v1677 = vand.u32 %v1676, 4294901760
    %1678 = vmatpush.msra.mxu0 %v1677
    %v1679 = vand.u32 %v46, 4294901760
    %v1680 = vsub.f32 %v46, %v1679
    %v1681 = vand.u32 %v1680, 4294901760
    %v1682 = vsub.f32 %v1680, %v1681
    %v1683 = vand.u32 %v1682, 4294901760
    %1684 = vmatpush.msra.mxu0 %v1683
    %v1685 = vand.u32 %v45, 4294901760
    %v1686 = vsub.f32 %v45, %v1685
    %v1687 = vand.u32 %v1686, 4294901760
    %v1688 = vsub.f32 %v1686, %v1687
    %v1689 = vand.u32 %v1688, 4294901760
    %1690 = vmatpush.msra.mxu0 %v1689
    %v1691 = vand.u32 %v44, 4294901760
    %v1692 = vsub.f32 %v44, %v1691
    %v1693 = vand.u32 %v1692, 4294901760
    %v1694 = vsub.f32 %v1692, %v1693
    %v1695 = vand.u32 %v1694, 4294901760
    %1696 = vmatpush.msra.mxu0 %v1695
    %v1697 = vand.u32 %v43, 4294901760
    %v1698 = vsub.f32 %v43, %v1697
    %v1699 = vand.u32 %v1698, 4294901760
    %v1700 = vsub.f32 %v1698, %v1699
    %v1701 = vand.u32 %v1700, 4294901760
    %1702 = vmatpush.msra.mxu0 %v1701
    %v1703 = vand.u32 %v42, 4294901760
    %v1704 = vsub.f32 %v42, %v1703
    %v1705 = vand.u32 %v1704, 4294901760
    %v1706 = vsub.f32 %v1704, %v1705
    %v1707 = vand.u32 %v1706, 4294901760
    %1708 = vmatpush.msra.mxu0 %v1707
    %v1709 = vand.u32 %v41, 4294901760
    %v1710 = vsub.f32 %v41, %v1709
    %v1711 = vand.u32 %v1710, 4294901760
    %v1712 = vsub.f32 %v1710, %v1711
    %v1713 = vand.u32 %v1712, 4294901760
    %1714 = vmatpush.msra.mxu0 %v1713
    %v1715 = vand.u32 %v1193, 4294901760
    %1716 = vmatmul.f32.gmra.mxu0 %v1715
    %v1717 = vpop.f32.mrf.mxu0
    %v1718 = vadd.f32 %v1609, %v1717
    %v1719 = vand.u32 %v1196, 4294901760
    %1720 = vmatmul.f32.gmra.mxu0 %v1719
    %v1721 = vpop.f32.mrf.mxu0
    %v1722 = vadd.f32 %v1617, %v1721
    %1723 = vdwg.mxu0
    %v1724 = vand.u32 %v56, 4294901760
    %v1725 = vsub.f32 %v56, %v1724
    %1726 = vmatpush.msra.mxu0 %v1725
    %v1727 = vand.u32 %v55, 4294901760
    %v1728 = vsub.f32 %v55, %v1727
    %1729 = vmatpush.msra.mxu0 %v1728
    %v1730 = vand.u32 %v54, 4294901760
    %v1731 = vsub.f32 %v54, %v1730
    %1732 = vmatpush.msra.mxu0 %v1731
    %v1733 = vand.u32 %v53, 4294901760
    %v1734 = vsub.f32 %v53, %v1733
    %1735 = vmatpush.msra.mxu0 %v1734
    %v1736 = vand.u32 %v52, 4294901760
    %v1737 = vsub.f32 %v52, %v1736
    %1738 = vmatpush.msra.mxu0 %v1737
    %v1739 = vand.u32 %v51, 4294901760
    %v1740 = vsub.f32 %v51, %v1739
    %1741 = vmatpush.msra.mxu0 %v1740
    %v1742 = vand.u32 %v50, 4294901760
    %v1743 = vsub.f32 %v50, %v1742
    %1744 = vmatpush.msra.mxu0 %v1743
    %v1745 = vand.u32 %v49, 4294901760
    %v1746 = vsub.f32 %v49, %v1745
    %1747 = vmatpush.msra.mxu0 %v1746
    %v1748 = vand.u32 %v48, 4294901760
    %v1749 = vsub.f32 %v48, %v1748
    %1750 = vmatpush.msra.mxu0 %v1749
    %v1751 = vand.u32 %v47, 4294901760
    %v1752 = vsub.f32 %v47, %v1751
    %1753 = vmatpush.msra.mxu0 %v1752
    %v1754 = vand.u32 %v46, 4294901760
    %v1755 = vsub.f32 %v46, %v1754
    %1756 = vmatpush.msra.mxu0 %v1755
    %v1757 = vand.u32 %v45, 4294901760
    %v1758 = vsub.f32 %v45, %v1757
    %1759 = vmatpush.msra.mxu0 %v1758
    %v1760 = vand.u32 %v44, 4294901760
    %v1761 = vsub.f32 %v44, %v1760
    %1762 = vmatpush.msra.mxu0 %v1761
    %v1763 = vand.u32 %v43, 4294901760
    %v1764 = vsub.f32 %v43, %v1763
    %1765 = vmatpush.msra.mxu0 %v1764
    %v1766 = vand.u32 %v42, 4294901760
    %v1767 = vsub.f32 %v42, %v1766
    %1768 = vmatpush.msra.mxu0 %v1767
    %v1769 = vand.u32 %v41, 4294901760
    %v1770 = vsub.f32 %v41, %v1769
    %1771 = vmatpush.msra.mxu0 %v1770
    %v1772 = vand.u32 %v1193, 4294901760
    %v1773 = vsub.f32 %v1193, %v1772
    %1774 = vmatmul.f32.gmra.mxu0 %v1773
    %v1775 = vpop.f32.mrf.mxu0
    %v1776 = vadd.f32 %v1718, %v1775
    %v1777 = vand.u32 %v1196, 4294901760
    %v1778 = vsub.f32 %v1196, %v1777
    %1779 = vmatmul.f32.gmra.mxu0 %v1778
    %v1780 = vpop.f32.mrf.mxu0
    %v1781 = vadd.f32 %v1722, %v1780
    %1782 = vdwg.mxu0
    %v1783 = vand.u32 %v56, 4294901760
    %1784 = vmatpush.msra.mxu0 %v1783
    %v1785 = vand.u32 %v55, 4294901760
    %1786 = vmatpush.msra.mxu0 %v1785
    %v1787 = vand.u32 %v54, 4294901760
    %1788 = vmatpush.msra.mxu0 %v1787
    %v1789 = vand.u32 %v53, 4294901760
    %1790 = vmatpush.msra.mxu0 %v1789
    %v1791 = vand.u32 %v52, 4294901760
    %1792 = vmatpush.msra.mxu0 %v1791
    %v1793 = vand.u32 %v51, 4294901760
    %1794 = vmatpush.msra.mxu0 %v1793
    %v1795 = vand.u32 %v50, 4294901760
    %1796 = vmatpush.msra.mxu0 %v1795
    %v1797 = vand.u32 %v49, 4294901760
    %1798 = vmatpush.msra.mxu0 %v1797
    %v1799 = vand.u32 %v48, 4294901760
    %1800 = vmatpush.msra.mxu0 %v1799
    %v1801 = vand.u32 %v47, 4294901760
    %1802 = vmatpush.msra.mxu0 %v1801
    %v1803 = vand.u32 %v46, 4294901760
    %1804 = vmatpush.msra.mxu0 %v1803
    %v1805 = vand.u32 %v45, 4294901760
    %1806 = vmatpush.msra.mxu0 %v1805
    %v1807 = vand.u32 %v44, 4294901760
    %1808 = vmatpush.msra.mxu0 %v1807
    %v1809 = vand.u32 %v43, 4294901760
    %1810 = vmatpush.msra.mxu0 %v1809
    %v1811 = vand.u32 %v42, 4294901760
    %1812 = vmatpush.msra.mxu0 %v1811
    %v1813 = vand.u32 %v41, 4294901760
    %1814 = vmatpush.msra.mxu0 %v1813
    %v1815 = vand.u32 %v1193, 4294901760
    %v1816 = vsub.f32 %v1193, %v1815
    %v1817 = vand.u32 %v1816, 4294901760
    %1818 = vmatmul.f32.gmra.mxu0 %v1817
    %v1819 = vpop.f32.mrf.mxu0
    %v1820 = vadd.f32 %v1776, %v1819
    %v1821 = vand.u32 %v1196, 4294901760
    %v1822 = vsub.f32 %v1196, %v1821
    %v1823 = vand.u32 %v1822, 4294901760
    %1824 = vmatmul.f32.gmra.mxu0 %v1823
    %v1825 = vpop.f32.mrf.mxu0
    %v1826 = vadd.f32 %v1781, %v1825
    %1827 = vdwg.mxu0
    %v1828 = vand.u32 %v56, 4294901760
    %v1829 = vsub.f32 %v56, %v1828
    %v1830 = vand.u32 %v1829, 4294901760
    %1831 = vmatpush.msra.mxu0 %v1830
    %v1832 = vand.u32 %v55, 4294901760
    %v1833 = vsub.f32 %v55, %v1832
    %v1834 = vand.u32 %v1833, 4294901760
    %1835 = vmatpush.msra.mxu0 %v1834
    %v1836 = vand.u32 %v54, 4294901760
    %v1837 = vsub.f32 %v54, %v1836
    %v1838 = vand.u32 %v1837, 4294901760
    %1839 = vmatpush.msra.mxu0 %v1838
    %v1840 = vand.u32 %v53, 4294901760
    %v1841 = vsub.f32 %v53, %v1840
    %v1842 = vand.u32 %v1841, 4294901760
    %1843 = vmatpush.msra.mxu0 %v1842
    %v1844 = vand.u32 %v52, 4294901760
    %v1845 = vsub.f32 %v52, %v1844
    %v1846 = vand.u32 %v1845, 4294901760
    %1847 = vmatpush.msra.mxu0 %v1846
    %v1848 = vand.u32 %v51, 4294901760
    %v1849 = vsub.f32 %v51, %v1848
    %v1850 = vand.u32 %v1849, 4294901760
    %1851 = vmatpush.msra.mxu0 %v1850
    %v1852 = vand.u32 %v50, 4294901760
    %v1853 = vsub.f32 %v50, %v1852
    %v1854 = vand.u32 %v1853, 4294901760
    %1855 = vmatpush.msra.mxu0 %v1854
    %v1856 = vand.u32 %v49, 4294901760
    %v1857 = vsub.f32 %v49, %v1856
    %v1858 = vand.u32 %v1857, 4294901760
    %1859 = vmatpush.msra.mxu0 %v1858
    %v1860 = vand.u32 %v48, 4294901760
    %v1861 = vsub.f32 %v48, %v1860
    %v1862 = vand.u32 %v1861, 4294901760
    %1863 = vmatpush.msra.mxu0 %v1862
    %v1864 = vand.u32 %v47, 4294901760
    %v1865 = vsub.f32 %v47, %v1864
    %v1866 = vand.u32 %v1865, 4294901760
    %1867 = vmatpush.msra.mxu0 %v1866
    %v1868 = vand.u32 %v46, 4294901760
    %v1869 = vsub.f32 %v46, %v1868
    %v1870 = vand.u32 %v1869, 4294901760
    %1871 = vmatpush.msra.mxu0 %v1870
    %v1872 = vand.u32 %v45, 4294901760
    %v1873 = vsub.f32 %v45, %v1872
    %v1874 = vand.u32 %v1873, 4294901760
    %1875 = vmatpush.msra.mxu0 %v1874
    %v1876 = vand.u32 %v44, 4294901760
    %v1877 = vsub.f32 %v44, %v1876
    %v1878 = vand.u32 %v1877, 4294901760
    %1879 = vmatpush.msra.mxu0 %v1878
    %v1880 = vand.u32 %v43, 4294901760
    %v1881 = vsub.f32 %v43, %v1880
    %v1882 = vand.u32 %v1881, 4294901760
    %1883 = vmatpush.msra.mxu0 %v1882
    %v1884 = vand.u32 %v42, 4294901760
    %v1885 = vsub.f32 %v42, %v1884
    %v1886 = vand.u32 %v1885, 4294901760
    %1887 = vmatpush.msra.mxu0 %v1886
    %v1888 = vand.u32 %v41, 4294901760
    %v1889 = vsub.f32 %v41, %v1888
    %v1890 = vand.u32 %v1889, 4294901760
    %1891 = vmatpush.msra.mxu0 %v1890
    %v1892 = vand.u32 %v1193, 4294901760
    %1893 = vmatmul.f32.gmra.mxu0 %v1892
    %v1894 = vpop.f32.mrf.mxu0
    %v1895 = vadd.f32 %v1820, %v1894
    %v1896 = vand.u32 %v1196, 4294901760
    %1897 = vmatmul.f32.gmra.mxu0 %v1896
    %v1898 = vpop.f32.mrf.mxu0
    %v1899 = vadd.f32 %v1826, %v1898
    %1900 = vdwg.mxu0
    %v1901 = vand.u32 %v56, 4294901760
    %1902 = vmatpush.msra.mxu0 %v1901
    %v1903 = vand.u32 %v55, 4294901760
    %1904 = vmatpush.msra.mxu0 %v1903
    %v1905 = vand.u32 %v54, 4294901760
    %1906 = vmatpush.msra.mxu0 %v1905
    %v1907 = vand.u32 %v53, 4294901760
    %1908 = vmatpush.msra.mxu0 %v1907
    %v1909 = vand.u32 %v52, 4294901760
    %1910 = vmatpush.msra.mxu0 %v1909
    %v1911 = vand.u32 %v51, 4294901760
    %1912 = vmatpush.msra.mxu0 %v1911
    %v1913 = vand.u32 %v50, 4294901760
    %1914 = vmatpush.msra.mxu0 %v1913
    %v1915 = vand.u32 %v49, 4294901760
    %1916 = vmatpush.msra.mxu0 %v1915
    %v1917 = vand.u32 %v48, 4294901760
    %1918 = vmatpush.msra.mxu0 %v1917
    %v1919 = vand.u32 %v47, 4294901760
    %1920 = vmatpush.msra.mxu0 %v1919
    %v1921 = vand.u32 %v46, 4294901760
    %1922 = vmatpush.msra.mxu0 %v1921
    %v1923 = vand.u32 %v45, 4294901760
    %1924 = vmatpush.msra.mxu0 %v1923
    %v1925 = vand.u32 %v44, 4294901760
    %1926 = vmatpush.msra.mxu0 %v1925
    %v1927 = vand.u32 %v43, 4294901760
    %1928 = vmatpush.msra.mxu0 %v1927
    %v1929 = vand.u32 %v42, 4294901760
    %1930 = vmatpush.msra.mxu0 %v1929
    %v1931 = vand.u32 %v41, 4294901760
    %1932 = vmatpush.msra.mxu0 %v1931
    %v1933 = vand.u32 %v1193, 4294901760
    %1934 = vmatmul.f32.gmra.mxu0 %v1933
    %v1935 = vpop.f32.mrf.mxu0
    %v1936 = vadd.f32 %v1895, %v1935
    %v1937 = vand.u32 %v1196, 4294901760
    %1938 = vmatmul.f32.gmra.mxu0 %v1937
    %v1939 = vpop.f32.mrf.mxu0
    %v1940 = vadd.f32 %v1899, %v1939
    %1941 = vdwg.mxu0
    %v1942 = vand.u32 %v72, 4294901760
    %1943 = vmatpush.msra.mxu0 %v1942
    %v1944 = vand.u32 %v71, 4294901760
    %1945 = vmatpush.msra.mxu0 %v1944
    %v1946 = vand.u32 %v70, 4294901760
    %1947 = vmatpush.msra.mxu0 %v1946
    %v1948 = vand.u32 %v69, 4294901760
    %1949 = vmatpush.msra.mxu0 %v1948
    %v1950 = vand.u32 %v68, 4294901760
    %1951 = vmatpush.msra.mxu0 %v1950
    %v1952 = vand.u32 %v67, 4294901760
    %1953 = vmatpush.msra.mxu0 %v1952
    %v1954 = vand.u32 %v66, 4294901760
    %1955 = vmatpush.msra.mxu0 %v1954
    %v1956 = vand.u32 %v65, 4294901760
    %1957 = vmatpush.msra.mxu0 %v1956
    %v1958 = vand.u32 %v64, 4294901760
    %1959 = vmatpush.msra.mxu0 %v1958
    %v1960 = vand.u32 %v63, 4294901760
    %1961 = vmatpush.msra.mxu0 %v1960
    %v1962 = vand.u32 %v62, 4294901760
    %1963 = vmatpush.msra.mxu0 %v1962
    %v1964 = vand.u32 %v61, 4294901760
    %1965 = vmatpush.msra.mxu0 %v1964
    %v1966 = vand.u32 %v60, 4294901760
    %1967 = vmatpush.msra.mxu0 %v1966
    %v1968 = vand.u32 %v59, 4294901760
    %1969 = vmatpush.msra.mxu0 %v1968
    %v1970 = vand.u32 %v58, 4294901760
    %1971 = vmatpush.msra.mxu0 %v1970
    %v1972 = vand.u32 %v57, 4294901760
    %1973 = vmatpush.msra.mxu0 %v1972
    %v1974 = vand.u32 %v1194, 4294901760
    %v1975 = vsub.f32 %v1194, %v1974
    %v1976 = vand.u32 %v1975, 4294901760
    %v1977 = vsub.f32 %v1975, %v1976
    %v1978 = vand.u32 %v1977, 4294901760
    %1979 = vmatmul.f32.gmra.mxu0 %v1978
    %v1980 = vpop.f32.mrf.mxu0
    %v1981 = vadd.f32 %v1936, %v1980
    %v1982 = vand.u32 %v1197, 4294901760
    %v1983 = vsub.f32 %v1197, %v1982
    %v1984 = vand.u32 %v1983, 4294901760
    %v1985 = vsub.f32 %v1983, %v1984
    %v1986 = vand.u32 %v1985, 4294901760
    %1987 = vmatmul.f32.gmra.mxu0 %v1986
    %v1988 = vpop.f32.mrf.mxu0
    %v1989 = vadd.f32 %v1940, %v1988
    %1990 = vdwg.mxu0
    %v1991 = vand.u32 %v72, 4294901760
    %v1992 = vsub.f32 %v72, %v1991
    %v1993 = vand.u32 %v1992, 4294901760
    %v1994 = vsub.f32 %v1992, %v1993
    %v1995 = vand.u32 %v1994, 4294901760
    %1996 = vmatpush.msra.mxu0 %v1995
    %v1997 = vand.u32 %v71, 4294901760
    %v1998 = vsub.f32 %v71, %v1997
    %v1999 = vand.u32 %v1998, 4294901760
    %v2000 = vsub.f32 %v1998, %v1999
    %v2001 = vand.u32 %v2000, 4294901760
    %2002 = vmatpush.msra.mxu0 %v2001
    %v2003 = vand.u32 %v70, 4294901760
    %v2004 = vsub.f32 %v70, %v2003
    %v2005 = vand.u32 %v2004, 4294901760
    %v2006 = vsub.f32 %v2004, %v2005
    %v2007 = vand.u32 %v2006, 4294901760
    %2008 = vmatpush.msra.mxu0 %v2007
    %v2009 = vand.u32 %v69, 4294901760
    %v2010 = vsub.f32 %v69, %v2009
    %v2011 = vand.u32 %v2010, 4294901760
    %v2012 = vsub.f32 %v2010, %v2011
    %v2013 = vand.u32 %v2012, 4294901760
    %2014 = vmatpush.msra.mxu0 %v2013
    %v2015 = vand.u32 %v68, 4294901760
    %v2016 = vsub.f32 %v68, %v2015
    %v2017 = vand.u32 %v2016, 4294901760
    %v2018 = vsub.f32 %v2016, %v2017
    %v2019 = vand.u32 %v2018, 4294901760
    %2020 = vmatpush.msra.mxu0 %v2019
    %v2021 = vand.u32 %v67, 4294901760
    %v2022 = vsub.f32 %v67, %v2021
    %v2023 = vand.u32 %v2022, 4294901760
    %v2024 = vsub.f32 %v2022, %v2023
    %v2025 = vand.u32 %v2024, 4294901760
    %2026 = vmatpush.msra.mxu0 %v2025
    %v2027 = vand.u32 %v66, 4294901760
    %v2028 = vsub.f32 %v66, %v2027
    %v2029 = vand.u32 %v2028, 4294901760
    %v2030 = vsub.f32 %v2028, %v2029
    %v2031 = vand.u32 %v2030, 4294901760
    %2032 = vmatpush.msra.mxu0 %v2031
    %v2033 = vand.u32 %v65, 4294901760
    %v2034 = vsub.f32 %v65, %v2033
    %v2035 = vand.u32 %v2034, 4294901760
    %v2036 = vsub.f32 %v2034, %v2035
    %v2037 = vand.u32 %v2036, 4294901760
    %2038 = vmatpush.msra.mxu0 %v2037
    %v2039 = vand.u32 %v64, 4294901760
    %v2040 = vsub.f32 %v64, %v2039
    %v2041 = vand.u32 %v2040, 4294901760
    %v2042 = vsub.f32 %v2040, %v2041
    %v2043 = vand.u32 %v2042, 4294901760
    %2044 = vmatpush.msra.mxu0 %v2043
    %v2045 = vand.u32 %v63, 4294901760
    %v2046 = vsub.f32 %v63, %v2045
    %v2047 = vand.u32 %v2046, 4294901760
    %v2048 = vsub.f32 %v2046, %v2047
    %v2049 = vand.u32 %v2048, 4294901760
    %2050 = vmatpush.msra.mxu0 %v2049
    %v2051 = vand.u32 %v62, 4294901760
    %v2052 = vsub.f32 %v62, %v2051
    %v2053 = vand.u32 %v2052, 4294901760
    %v2054 = vsub.f32 %v2052, %v2053
    %v2055 = vand.u32 %v2054, 4294901760
    %2056 = vmatpush.msra.mxu0 %v2055
    %v2057 = vand.u32 %v61, 4294901760
    %v2058 = vsub.f32 %v61, %v2057
    %v2059 = vand.u32 %v2058, 4294901760
    %v2060 = vsub.f32 %v2058, %v2059
    %v2061 = vand.u32 %v2060, 4294901760
    %2062 = vmatpush.msra.mxu0 %v2061
    %v2063 = vand.u32 %v60, 4294901760
    %v2064 = vsub.f32 %v60, %v2063
    %v2065 = vand.u32 %v2064, 4294901760
    %v2066 = vsub.f32 %v2064, %v2065
    %v2067 = vand.u32 %v2066, 4294901760
    %2068 = vmatpush.msra.mxu0 %v2067
    %v2069 = vand.u32 %v59, 4294901760
    %v2070 = vsub.f32 %v59, %v2069
    %v2071 = vand.u32 %v2070, 4294901760
    %v2072 = vsub.f32 %v2070, %v2071
    %v2073 = vand.u32 %v2072, 4294901760
    %2074 = vmatpush.msra.mxu0 %v2073
    %v2075 = vand.u32 %v58, 4294901760
    %v2076 = vsub.f32 %v58, %v2075
    %v2077 = vand.u32 %v2076, 4294901760
    %v2078 = vsub.f32 %v2076, %v2077
    %v2079 = vand.u32 %v2078, 4294901760
    %2080 = vmatpush.msra.mxu0 %v2079
    %v2081 = vand.u32 %v57, 4294901760
    %v2082 = vsub.f32 %v57, %v2081
    %v2083 = vand.u32 %v2082, 4294901760
    %v2084 = vsub.f32 %v2082, %v2083
    %v2085 = vand.u32 %v2084, 4294901760
    %2086 = vmatpush.msra.mxu0 %v2085
    %v2087 = vand.u32 %v1194, 4294901760
    %2088 = vmatmul.f32.gmra.mxu0 %v2087
    %v2089 = vpop.f32.mrf.mxu0
    %v2090 = vadd.f32 %v1981, %v2089
    %v2091 = vand.u32 %v1197, 4294901760
    %2092 = vmatmul.f32.gmra.mxu0 %v2091
    %v2093 = vpop.f32.mrf.mxu0
    %v2094 = vadd.f32 %v1989, %v2093
    %2095 = vdwg.mxu0
    %v2096 = vand.u32 %v72, 4294901760
    %v2097 = vsub.f32 %v72, %v2096
    %2098 = vmatpush.msra.mxu0 %v2097
    %v2099 = vand.u32 %v71, 4294901760
    %v2100 = vsub.f32 %v71, %v2099
    %2101 = vmatpush.msra.mxu0 %v2100
    %v2102 = vand.u32 %v70, 4294901760
    %v2103 = vsub.f32 %v70, %v2102
    %2104 = vmatpush.msra.mxu0 %v2103
    %v2105 = vand.u32 %v69, 4294901760
    %v2106 = vsub.f32 %v69, %v2105
    %2107 = vmatpush.msra.mxu0 %v2106
    %v2108 = vand.u32 %v68, 4294901760
    %v2109 = vsub.f32 %v68, %v2108
    %2110 = vmatpush.msra.mxu0 %v2109
    %v2111 = vand.u32 %v67, 4294901760
    %v2112 = vsub.f32 %v67, %v2111
    %2113 = vmatpush.msra.mxu0 %v2112
    %v2114 = vand.u32 %v66, 4294901760
    %v2115 = vsub.f32 %v66, %v2114
    %2116 = vmatpush.msra.mxu0 %v2115
    %v2117 = vand.u32 %v65, 4294901760
    %v2118 = vsub.f32 %v65, %v2117
    %2119 = vmatpush.msra.mxu0 %v2118
    %v2120 = vand.u32 %v64, 4294901760
    %v2121 = vsub.f32 %v64, %v2120
    %2122 = vmatpush.msra.mxu0 %v2121
    %v2123 = vand.u32 %v63, 4294901760
    %v2124 = vsub.f32 %v63, %v2123
    %2125 = vmatpush.msra.mxu0 %v2124
    %v2126 = vand.u32 %v62, 4294901760
    %v2127 = vsub.f32 %v62, %v2126
    %2128 = vmatpush.msra.mxu0 %v2127
    %v2129 = vand.u32 %v61, 4294901760
    %v2130 = vsub.f32 %v61, %v2129
    %2131 = vmatpush.msra.mxu0 %v2130
    %v2132 = vand.u32 %v60, 4294901760
    %v2133 = vsub.f32 %v60, %v2132
    %2134 = vmatpush.msra.mxu0 %v2133
    %v2135 = vand.u32 %v59, 4294901760
    %v2136 = vsub.f32 %v59, %v2135
    %2137 = vmatpush.msra.mxu0 %v2136
    %v2138 = vand.u32 %v58, 4294901760
    %v2139 = vsub.f32 %v58, %v2138
    %2140 = vmatpush.msra.mxu0 %v2139
    %v2141 = vand.u32 %v57, 4294901760
    %v2142 = vsub.f32 %v57, %v2141
    %2143 = vmatpush.msra.mxu0 %v2142
    %v2144 = vand.u32 %v1194, 4294901760
    %v2145 = vsub.f32 %v1194, %v2144
    %2146 = vmatmul.f32.gmra.mxu0 %v2145
    %v2147 = vpop.f32.mrf.mxu0
    %v2148 = vadd.f32 %v2090, %v2147
    %v2149 = vand.u32 %v1197, 4294901760
    %v2150 = vsub.f32 %v1197, %v2149
    %2151 = vmatmul.f32.gmra.mxu0 %v2150
    %v2152 = vpop.f32.mrf.mxu0
    %v2153 = vadd.f32 %v2094, %v2152
    %2154 = vdwg.mxu0
    %v2155 = vand.u32 %v72, 4294901760
    %2156 = vmatpush.msra.mxu0 %v2155
    %v2157 = vand.u32 %v71, 4294901760
    %2158 = vmatpush.msra.mxu0 %v2157
    %v2159 = vand.u32 %v70, 4294901760
    %2160 = vmatpush.msra.mxu0 %v2159
    %v2161 = vand.u32 %v69, 4294901760
    %2162 = vmatpush.msra.mxu0 %v2161
    %v2163 = vand.u32 %v68, 4294901760
    %2164 = vmatpush.msra.mxu0 %v2163
    %v2165 = vand.u32 %v67, 4294901760
    %2166 = vmatpush.msra.mxu0 %v2165
    %v2167 = vand.u32 %v66, 4294901760
    %2168 = vmatpush.msra.mxu0 %v2167
    %v2169 = vand.u32 %v65, 4294901760
    %2170 = vmatpush.msra.mxu0 %v2169
    %v2171 = vand.u32 %v64, 4294901760
    %2172 = vmatpush.msra.mxu0 %v2171
    %v2173 = vand.u32 %v63, 4294901760
    %2174 = vmatpush.msra.mxu0 %v2173
    %v2175 = vand.u32 %v62, 4294901760
    %2176 = vmatpush.msra.mxu0 %v2175
    %v2177 = vand.u32 %v61, 4294901760
    %2178 = vmatpush.msra.mxu0 %v2177
    %v2179 = vand.u32 %v60, 4294901760
    %2180 = vmatpush.msra.mxu0 %v2179
    %v2181 = vand.u32 %v59, 4294901760
    %2182 = vmatpush.msra.mxu0 %v2181
    %v2183 = vand.u32 %v58, 4294901760
    %2184 = vmatpush.msra.mxu0 %v2183
    %v2185 = vand.u32 %v57, 4294901760
    %2186 = vmatpush.msra.mxu0 %v2185
    %v2187 = vand.u32 %v1194, 4294901760
    %v2188 = vsub.f32 %v1194, %v2187
    %v2189 = vand.u32 %v2188, 4294901760
    %2190 = vmatmul.f32.gmra.mxu0 %v2189
    %v2191 = vpop.f32.mrf.mxu0
    %v2192 = vadd.f32 %v2148, %v2191
    %v2193 = vand.u32 %v1197, 4294901760
    %v2194 = vsub.f32 %v1197, %v2193
    %v2195 = vand.u32 %v2194, 4294901760
    %2196 = vmatmul.f32.gmra.mxu0 %v2195
    %v2197 = vpop.f32.mrf.mxu0
    %v2198 = vadd.f32 %v2153, %v2197
    %2199 = vdwg.mxu0
    %v2200 = vand.u32 %v72, 4294901760
    %v2201 = vsub.f32 %v72, %v2200
    %v2202 = vand.u32 %v2201, 4294901760
    %2203 = vmatpush.msra.mxu0 %v2202
    %v2204 = vand.u32 %v71, 4294901760
    %v2205 = vsub.f32 %v71, %v2204
    %v2206 = vand.u32 %v2205, 4294901760
    %2207 = vmatpush.msra.mxu0 %v2206
    %v2208 = vand.u32 %v70, 4294901760
    %v2209 = vsub.f32 %v70, %v2208
    %v2210 = vand.u32 %v2209, 4294901760
    %2211 = vmatpush.msra.mxu0 %v2210
    %v2212 = vand.u32 %v69, 4294901760
    %v2213 = vsub.f32 %v69, %v2212
    %v2214 = vand.u32 %v2213, 4294901760
    %2215 = vmatpush.msra.mxu0 %v2214
    %v2216 = vand.u32 %v68, 4294901760
    %v2217 = vsub.f32 %v68, %v2216
    %v2218 = vand.u32 %v2217, 4294901760
    %2219 = vmatpush.msra.mxu0 %v2218
    %v2220 = vand.u32 %v67, 4294901760
    %v2221 = vsub.f32 %v67, %v2220
    %v2222 = vand.u32 %v2221, 4294901760
    %2223 = vmatpush.msra.mxu0 %v2222
    %v2224 = vand.u32 %v66, 4294901760
    %v2225 = vsub.f32 %v66, %v2224
    %v2226 = vand.u32 %v2225, 4294901760
    %2227 = vmatpush.msra.mxu0 %v2226
    %v2228 = vand.u32 %v65, 4294901760
    %v2229 = vsub.f32 %v65, %v2228
    %v2230 = vand.u32 %v2229, 4294901760
    %2231 = vmatpush.msra.mxu0 %v2230
    %v2232 = vand.u32 %v64, 4294901760
    %v2233 = vsub.f32 %v64, %v2232
    %v2234 = vand.u32 %v2233, 4294901760
    %2235 = vmatpush.msra.mxu0 %v2234
    %v2236 = vand.u32 %v63, 4294901760
    %v2237 = vsub.f32 %v63, %v2236
    %v2238 = vand.u32 %v2237, 4294901760
    %2239 = vmatpush.msra.mxu0 %v2238
    %v2240 = vand.u32 %v62, 4294901760
    %v2241 = vsub.f32 %v62, %v2240
    %v2242 = vand.u32 %v2241, 4294901760
    %2243 = vmatpush.msra.mxu0 %v2242
    %v2244 = vand.u32 %v61, 4294901760
    %v2245 = vsub.f32 %v61, %v2244
    %v2246 = vand.u32 %v2245, 4294901760
    %2247 = vmatpush.msra.mxu0 %v2246
    %v2248 = vand.u32 %v60, 4294901760
    %v2249 = vsub.f32 %v60, %v2248
    %v2250 = vand.u32 %v2249, 4294901760
    %2251 = vmatpush.msra.mxu0 %v2250
    %v2252 = vand.u32 %v59, 4294901760
    %v2253 = vsub.f32 %v59, %v2252
    %v2254 = vand.u32 %v2253, 4294901760
    %2255 = vmatpush.msra.mxu0 %v2254
    %v2256 = vand.u32 %v58, 4294901760
    %v2257 = vsub.f32 %v58, %v2256
    %v2258 = vand.u32 %v2257, 4294901760
    %2259 = vmatpush.msra.mxu0 %v2258
    %v2260 = vand.u32 %v57, 4294901760
    %v2261 = vsub.f32 %v57, %v2260
    %v2262 = vand.u32 %v2261, 4294901760
    %2263 = vmatpush.msra.mxu0 %v2262
    %v2264 = vand.u32 %v1194, 4294901760
    %2265 = vmatmul.f32.gmra.mxu0 %v2264
    %v2266 = vpop.f32.mrf.mxu0
    %v2267 = vadd.f32 %v2192, %v2266
    %v2268 = vand.u32 %v1197, 4294901760
    %2269 = vmatmul.f32.gmra.mxu0 %v2268
    %v2270 = vpop.f32.mrf.mxu0
    %v2271 = vadd.f32 %v2198, %v2270
    %2272 = vdwg.mxu0
    %v2273 = vand.u32 %v72, 4294901760
    %2274 = vmatpush.msra.mxu0 %v2273
    %v2275 = vand.u32 %v71, 4294901760
    %2276 = vmatpush.msra.mxu0 %v2275
    %v2277 = vand.u32 %v70, 4294901760
    %2278 = vmatpush.msra.mxu0 %v2277
    %v2279 = vand.u32 %v69, 4294901760
    %2280 = vmatpush.msra.mxu0 %v2279
    %v2281 = vand.u32 %v68, 4294901760
    %2282 = vmatpush.msra.mxu0 %v2281
    %v2283 = vand.u32 %v67, 4294901760
    %2284 = vmatpush.msra.mxu0 %v2283
    %v2285 = vand.u32 %v66, 4294901760
    %2286 = vmatpush.msra.mxu0 %v2285
    %v2287 = vand.u32 %v65, 4294901760
    %2288 = vmatpush.msra.mxu0 %v2287
    %v2289 = vand.u32 %v64, 4294901760
    %2290 = vmatpush.msra.mxu0 %v2289
    %v2291 = vand.u32 %v63, 4294901760
    %2292 = vmatpush.msra.mxu0 %v2291
    %v2293 = vand.u32 %v62, 4294901760
    %2294 = vmatpush.msra.mxu0 %v2293
    %v2295 = vand.u32 %v61, 4294901760
    %2296 = vmatpush.msra.mxu0 %v2295
    %v2297 = vand.u32 %v60, 4294901760
    %2298 = vmatpush.msra.mxu0 %v2297
    %v2299 = vand.u32 %v59, 4294901760
    %2300 = vmatpush.msra.mxu0 %v2299
    %v2301 = vand.u32 %v58, 4294901760
    %2302 = vmatpush.msra.mxu0 %v2301
    %v2303 = vand.u32 %v57, 4294901760
    %2304 = vmatpush.msra.mxu0 %v2303
    %v2305 = vand.u32 %v1194, 4294901760
    %2306 = vmatmul.f32.gmra.mxu0 %v2305
    %v2307 = vpop.f32.mrf.mxu0
    %v2308 = vadd.f32 %v2267, %v2307
    %v2309 = vand.u32 %v1197, 4294901760
    %2310 = vmatmul.f32.gmra.mxu0 %v2309
    %v2311 = vpop.f32.mrf.mxu0
    %v2312 = vadd.f32 %v2271, %v2311
    %2313 = vdwg.mxu0
    %v2314 = vmul.f32 %v1186, 0.020833334
    %v2315 = vmul.f32 %v1190, 0.020833334
    %v2316 = vmul.f32 %v2308, 0.020833334
    %v2317 = vmul.f32 %v2312, 0.020833334
    %v2318 = vmul.f32 %v2314, %v2314
    %v2319 = vmul.f32 %v2315, %v2315
    %v2320 = vsub.f32 %v2316, %v2318
    %v2321 = vsub.f32 %v2317, %v2319
    %v2322 = vmax.f32 %v2320, 0.0
    %v2323 = vmax.f32 %v2321, 0.0
    %v2324 = vadd.f32 %v2322, 1e-05
    %v2325 = vadd.f32 %v2323, 1e-05
    %v2326 = vrsqrt.pop %v2324
    %v2327 = vmul.f32 %v2326, %v2324
    %v2328 = vmul.f32 %v2327, %v2326
    %v2329 = vmul.f32 0.5, %v2328
    %v2330 = vsub.f32 1.5, %v2329
    %v2331 = vmul.f32 %v2326, %v2330
    %vm2332 = vweird.f32 %v2324
    %vm2333 = vweird.f32 %v2326
    %vm2334 = vmor %vm2332, %vm2333
    %v2335 = vsel %vm2334, %v2326, %v2331
    %v2336 = vrsqrt.pop %v2325
    %v2337 = vmul.f32 %v2336, %v2325
    %v2338 = vmul.f32 %v2337, %v2336
    %v2339 = vmul.f32 0.5, %v2338
    %v2340 = vsub.f32 1.5, %v2339
    %v2341 = vmul.f32 %v2336, %v2340
    %vm2342 = vweird.f32 %v2325
    %vm2343 = vweird.f32 %v2336
    %vm2344 = vmor %vm2342, %vm2343
    %v2345 = vsel %vm2344, %v2336, %v2341
    %vm2346 = vcmask 64512
    %v2348 = vsel %vm2346, %v2335, 0
    %v2351 = vsel %vm2346, %v2345, 0
    %2353 = vmatpush.msra.mxu0 0.0
    %2354 = vmatpush.msra.mxu0 0.0
    %2355 = vmatpush.msra.mxu0 0.0
    %2356 = vmatpush.msra.mxu0 0.0
    %2357 = vmatpush.msra.mxu0 0.0
    %2358 = vmatpush.msra.mxu0 0.0
    %2359 = vmatpush.msra.mxu0 0.0
    %2360 = vmatpush.msra.mxu0 0.0
    %2361 = vmatpush.msra.mxu0 0.0
    %2362 = vmatpush.msra.mxu0 0.0
    %2363 = vmatpush.msra.mxu0 0.0
    %2364 = vmatpush.msra.mxu0 0.0
    %2365 = vmatpush.msra.mxu0 0.0
    %2366 = vmatpush.msra.mxu0 0.0
    %2367 = vmatpush.msra.mxu0 0.0
    %v2368 = vand.u32 %v73, 4294901760
    %2369 = vmatpush.msra.mxu0 %v2368
    %v2370 = vand.u32 %v2348, 4294901760
    %v2371 = vsub.f32 %v2348, %v2370
    %v2372 = vand.u32 %v2371, 4294901760
    %v2373 = vsub.f32 %v2371, %v2372
    %v2374 = vand.u32 %v2373, 4294901760
    %2375 = vmatmul.f32.gmra.mxu0 %v2374
    %v2376 = vpop.f32.mrf.mxu0
    %v2377 = vadd.f32 0.0, %v2376
    %v2378 = vand.u32 %v2351, 4294901760
    %v2379 = vsub.f32 %v2351, %v2378
    %v2380 = vand.u32 %v2379, 4294901760
    %v2381 = vsub.f32 %v2379, %v2380
    %v2382 = vand.u32 %v2381, 4294901760
    %2383 = vmatmul.f32.gmra.mxu0 %v2382
    %v2384 = vpop.f32.mrf.mxu0
    %v2385 = vadd.f32 0.0, %v2384
    %2386 = vdwg.mxu0
    %2387 = vmatpush.msra.mxu0 0.0
    %2388 = vmatpush.msra.mxu0 0.0
    %2389 = vmatpush.msra.mxu0 0.0
    %2390 = vmatpush.msra.mxu0 0.0
    %2391 = vmatpush.msra.mxu0 0.0
    %2392 = vmatpush.msra.mxu0 0.0
    %2393 = vmatpush.msra.mxu0 0.0
    %2394 = vmatpush.msra.mxu0 0.0
    %2395 = vmatpush.msra.mxu0 0.0
    %2396 = vmatpush.msra.mxu0 0.0
    %2397 = vmatpush.msra.mxu0 0.0
    %2398 = vmatpush.msra.mxu0 0.0
    %2399 = vmatpush.msra.mxu0 0.0
    %2400 = vmatpush.msra.mxu0 0.0
    %2401 = vmatpush.msra.mxu0 0.0
    %v2402 = vand.u32 %v73, 4294901760
    %v2403 = vsub.f32 %v73, %v2402
    %v2404 = vand.u32 %v2403, 4294901760
    %v2405 = vsub.f32 %v2403, %v2404
    %v2406 = vand.u32 %v2405, 4294901760
    %2407 = vmatpush.msra.mxu0 %v2406
    %v2408 = vand.u32 %v2348, 4294901760
    %2409 = vmatmul.f32.gmra.mxu0 %v2408
    %v2410 = vpop.f32.mrf.mxu0
    %v2411 = vadd.f32 %v2377, %v2410
    %v2412 = vand.u32 %v2351, 4294901760
    %2413 = vmatmul.f32.gmra.mxu0 %v2412
    %v2414 = vpop.f32.mrf.mxu0
    %v2415 = vadd.f32 %v2385, %v2414
    %2416 = vdwg.mxu0
    %2417 = vmatpush.msra.mxu0 0.0
    %2418 = vmatpush.msra.mxu0 0.0
    %2419 = vmatpush.msra.mxu0 0.0
    %2420 = vmatpush.msra.mxu0 0.0
    %2421 = vmatpush.msra.mxu0 0.0
    %2422 = vmatpush.msra.mxu0 0.0
    %2423 = vmatpush.msra.mxu0 0.0
    %2424 = vmatpush.msra.mxu0 0.0
    %2425 = vmatpush.msra.mxu0 0.0
    %2426 = vmatpush.msra.mxu0 0.0
    %2427 = vmatpush.msra.mxu0 0.0
    %2428 = vmatpush.msra.mxu0 0.0
    %2429 = vmatpush.msra.mxu0 0.0
    %2430 = vmatpush.msra.mxu0 0.0
    %2431 = vmatpush.msra.mxu0 0.0
    %v2432 = vand.u32 %v73, 4294901760
    %v2433 = vsub.f32 %v73, %v2432
    %2434 = vmatpush.msra.mxu0 %v2433
    %v2435 = vand.u32 %v2348, 4294901760
    %v2436 = vsub.f32 %v2348, %v2435
    %2437 = vmatmul.f32.gmra.mxu0 %v2436
    %v2438 = vpop.f32.mrf.mxu0
    %v2439 = vadd.f32 %v2411, %v2438
    %v2440 = vand.u32 %v2351, 4294901760
    %v2441 = vsub.f32 %v2351, %v2440
    %2442 = vmatmul.f32.gmra.mxu0 %v2441
    %v2443 = vpop.f32.mrf.mxu0
    %v2444 = vadd.f32 %v2415, %v2443
    %2445 = vdwg.mxu0
    %2446 = vmatpush.msra.mxu0 0.0
    %2447 = vmatpush.msra.mxu0 0.0
    %2448 = vmatpush.msra.mxu0 0.0
    %2449 = vmatpush.msra.mxu0 0.0
    %2450 = vmatpush.msra.mxu0 0.0
    %2451 = vmatpush.msra.mxu0 0.0
    %2452 = vmatpush.msra.mxu0 0.0
    %2453 = vmatpush.msra.mxu0 0.0
    %2454 = vmatpush.msra.mxu0 0.0
    %2455 = vmatpush.msra.mxu0 0.0
    %2456 = vmatpush.msra.mxu0 0.0
    %2457 = vmatpush.msra.mxu0 0.0
    %2458 = vmatpush.msra.mxu0 0.0
    %2459 = vmatpush.msra.mxu0 0.0
    %2460 = vmatpush.msra.mxu0 0.0
    %v2461 = vand.u32 %v73, 4294901760
    %2462 = vmatpush.msra.mxu0 %v2461
    %v2463 = vand.u32 %v2348, 4294901760
    %v2464 = vsub.f32 %v2348, %v2463
    %v2465 = vand.u32 %v2464, 4294901760
    %2466 = vmatmul.f32.gmra.mxu0 %v2465
    %v2467 = vpop.f32.mrf.mxu0
    %v2468 = vadd.f32 %v2439, %v2467
    %v2469 = vand.u32 %v2351, 4294901760
    %v2470 = vsub.f32 %v2351, %v2469
    %v2471 = vand.u32 %v2470, 4294901760
    %2472 = vmatmul.f32.gmra.mxu0 %v2471
    %v2473 = vpop.f32.mrf.mxu0
    %v2474 = vadd.f32 %v2444, %v2473
    %2475 = vdwg.mxu0
    %2476 = vmatpush.msra.mxu0 0.0
    %2477 = vmatpush.msra.mxu0 0.0
    %2478 = vmatpush.msra.mxu0 0.0
    %2479 = vmatpush.msra.mxu0 0.0
    %2480 = vmatpush.msra.mxu0 0.0
    %2481 = vmatpush.msra.mxu0 0.0
    %2482 = vmatpush.msra.mxu0 0.0
    %2483 = vmatpush.msra.mxu0 0.0
    %2484 = vmatpush.msra.mxu0 0.0
    %2485 = vmatpush.msra.mxu0 0.0
    %2486 = vmatpush.msra.mxu0 0.0
    %2487 = vmatpush.msra.mxu0 0.0
    %2488 = vmatpush.msra.mxu0 0.0
    %2489 = vmatpush.msra.mxu0 0.0
    %2490 = vmatpush.msra.mxu0 0.0
    %v2491 = vand.u32 %v73, 4294901760
    %v2492 = vsub.f32 %v73, %v2491
    %v2493 = vand.u32 %v2492, 4294901760
    %2494 = vmatpush.msra.mxu0 %v2493
    %v2495 = vand.u32 %v2348, 4294901760
    %2496 = vmatmul.f32.gmra.mxu0 %v2495
    %v2497 = vpop.f32.mrf.mxu0
    %v2498 = vadd.f32 %v2468, %v2497
    %v2499 = vand.u32 %v2351, 4294901760
    %2500 = vmatmul.f32.gmra.mxu0 %v2499
    %v2501 = vpop.f32.mrf.mxu0
    %v2502 = vadd.f32 %v2474, %v2501
    %2503 = vdwg.mxu0
    %2504 = vmatpush.msra.mxu0 0.0
    %2505 = vmatpush.msra.mxu0 0.0
    %2506 = vmatpush.msra.mxu0 0.0
    %2507 = vmatpush.msra.mxu0 0.0
    %2508 = vmatpush.msra.mxu0 0.0
    %2509 = vmatpush.msra.mxu0 0.0
    %2510 = vmatpush.msra.mxu0 0.0
    %2511 = vmatpush.msra.mxu0 0.0
    %2512 = vmatpush.msra.mxu0 0.0
    %2513 = vmatpush.msra.mxu0 0.0
    %2514 = vmatpush.msra.mxu0 0.0
    %2515 = vmatpush.msra.mxu0 0.0
    %2516 = vmatpush.msra.mxu0 0.0
    %2517 = vmatpush.msra.mxu0 0.0
    %2518 = vmatpush.msra.mxu0 0.0
    %v2519 = vand.u32 %v73, 4294901760
    %2520 = vmatpush.msra.mxu0 %v2519
    %v2521 = vand.u32 %v2348, 4294901760
    %2522 = vmatmul.f32.gmra.mxu0 %v2521
    %v2523 = vpop.f32.mrf.mxu0
    %v2524 = vadd.f32 %v2498, %v2523
    %v2525 = vand.u32 %v2351, 4294901760
    %2526 = vmatmul.f32.gmra.mxu0 %v2525
    %v2527 = vpop.f32.mrf.mxu0
    %v2528 = vadd.f32 %v2502, %v2527
    %2529 = vdwg.mxu0
    %2530 = vmatpush.msra.mxu0 0.0
    %2531 = vmatpush.msra.mxu0 0.0
    %2532 = vmatpush.msra.mxu0 0.0
    %2533 = vmatpush.msra.mxu0 0.0
    %2534 = vmatpush.msra.mxu0 0.0
    %2535 = vmatpush.msra.mxu0 0.0
    %2536 = vmatpush.msra.mxu0 0.0
    %2537 = vmatpush.msra.mxu0 0.0
    %2538 = vmatpush.msra.mxu0 0.0
    %2539 = vmatpush.msra.mxu0 0.0
    %2540 = vmatpush.msra.mxu0 0.0
    %2541 = vmatpush.msra.mxu0 0.0
    %2542 = vmatpush.msra.mxu0 0.0
    %2543 = vmatpush.msra.mxu0 0.0
    %2544 = vmatpush.msra.mxu0 0.0
    %v2545 = vand.u32 %v74, 4294901760
    %2546 = vmatpush.msra.mxu0 %v2545
    %v2547 = vand.u32 %v2348, 4294901760
    %v2548 = vsub.f32 %v2348, %v2547
    %v2549 = vand.u32 %v2548, 4294901760
    %v2550 = vsub.f32 %v2548, %v2549
    %v2551 = vand.u32 %v2550, 4294901760
    %2552 = vmatmul.f32.gmra.mxu0 %v2551
    %v2553 = vpop.f32.mrf.mxu0
    %v2554 = vadd.f32 0.0, %v2553
    %v2555 = vand.u32 %v2351, 4294901760
    %v2556 = vsub.f32 %v2351, %v2555
    %v2557 = vand.u32 %v2556, 4294901760
    %v2558 = vsub.f32 %v2556, %v2557
    %v2559 = vand.u32 %v2558, 4294901760
    %2560 = vmatmul.f32.gmra.mxu0 %v2559
    %v2561 = vpop.f32.mrf.mxu0
    %v2562 = vadd.f32 0.0, %v2561
    %2563 = vdwg.mxu0
    %2564 = vmatpush.msra.mxu0 0.0
    %2565 = vmatpush.msra.mxu0 0.0
    %2566 = vmatpush.msra.mxu0 0.0
    %2567 = vmatpush.msra.mxu0 0.0
    %2568 = vmatpush.msra.mxu0 0.0
    %2569 = vmatpush.msra.mxu0 0.0
    %2570 = vmatpush.msra.mxu0 0.0
    %2571 = vmatpush.msra.mxu0 0.0
    %2572 = vmatpush.msra.mxu0 0.0
    %2573 = vmatpush.msra.mxu0 0.0
    %2574 = vmatpush.msra.mxu0 0.0
    %2575 = vmatpush.msra.mxu0 0.0
    %2576 = vmatpush.msra.mxu0 0.0
    %2577 = vmatpush.msra.mxu0 0.0
    %2578 = vmatpush.msra.mxu0 0.0
    %v2579 = vand.u32 %v74, 4294901760
    %v2580 = vsub.f32 %v74, %v2579
    %v2581 = vand.u32 %v2580, 4294901760
    %v2582 = vsub.f32 %v2580, %v2581
    %v2583 = vand.u32 %v2582, 4294901760
    %2584 = vmatpush.msra.mxu0 %v2583
    %v2585 = vand.u32 %v2348, 4294901760
    %2586 = vmatmul.f32.gmra.mxu0 %v2585
    %v2587 = vpop.f32.mrf.mxu0
    %v2588 = vadd.f32 %v2554, %v2587
    %v2589 = vand.u32 %v2351, 4294901760
    %2590 = vmatmul.f32.gmra.mxu0 %v2589
    %v2591 = vpop.f32.mrf.mxu0
    %v2592 = vadd.f32 %v2562, %v2591
    %2593 = vdwg.mxu0
    %2594 = vmatpush.msra.mxu0 0.0
    %2595 = vmatpush.msra.mxu0 0.0
    %2596 = vmatpush.msra.mxu0 0.0
    %2597 = vmatpush.msra.mxu0 0.0
    %2598 = vmatpush.msra.mxu0 0.0
    %2599 = vmatpush.msra.mxu0 0.0
    %2600 = vmatpush.msra.mxu0 0.0
    %2601 = vmatpush.msra.mxu0 0.0
    %2602 = vmatpush.msra.mxu0 0.0
    %2603 = vmatpush.msra.mxu0 0.0
    %2604 = vmatpush.msra.mxu0 0.0
    %2605 = vmatpush.msra.mxu0 0.0
    %2606 = vmatpush.msra.mxu0 0.0
    %2607 = vmatpush.msra.mxu0 0.0
    %2608 = vmatpush.msra.mxu0 0.0
    %v2609 = vand.u32 %v74, 4294901760
    %v2610 = vsub.f32 %v74, %v2609
    %2611 = vmatpush.msra.mxu0 %v2610
    %v2612 = vand.u32 %v2348, 4294901760
    %v2613 = vsub.f32 %v2348, %v2612
    %2614 = vmatmul.f32.gmra.mxu0 %v2613
    %v2615 = vpop.f32.mrf.mxu0
    %v2616 = vadd.f32 %v2588, %v2615
    %v2617 = vand.u32 %v2351, 4294901760
    %v2618 = vsub.f32 %v2351, %v2617
    %2619 = vmatmul.f32.gmra.mxu0 %v2618
    %v2620 = vpop.f32.mrf.mxu0
    %v2621 = vadd.f32 %v2592, %v2620
    %2622 = vdwg.mxu0
    %2623 = vmatpush.msra.mxu0 0.0
    %2624 = vmatpush.msra.mxu0 0.0
    %2625 = vmatpush.msra.mxu0 0.0
    %2626 = vmatpush.msra.mxu0 0.0
    %2627 = vmatpush.msra.mxu0 0.0
    %2628 = vmatpush.msra.mxu0 0.0
    %2629 = vmatpush.msra.mxu0 0.0
    %2630 = vmatpush.msra.mxu0 0.0
    %2631 = vmatpush.msra.mxu0 0.0
    %2632 = vmatpush.msra.mxu0 0.0
    %2633 = vmatpush.msra.mxu0 0.0
    %2634 = vmatpush.msra.mxu0 0.0
    %2635 = vmatpush.msra.mxu0 0.0
    %2636 = vmatpush.msra.mxu0 0.0
    %2637 = vmatpush.msra.mxu0 0.0
    %v2638 = vand.u32 %v74, 4294901760
    %2639 = vmatpush.msra.mxu0 %v2638
    %v2640 = vand.u32 %v2348, 4294901760
    %v2641 = vsub.f32 %v2348, %v2640
    %v2642 = vand.u32 %v2641, 4294901760
    %2643 = vmatmul.f32.gmra.mxu0 %v2642
    %v2644 = vpop.f32.mrf.mxu0
    %v2645 = vadd.f32 %v2616, %v2644
    %v2646 = vand.u32 %v2351, 4294901760
    %v2647 = vsub.f32 %v2351, %v2646
    %v2648 = vand.u32 %v2647, 4294901760
    %2649 = vmatmul.f32.gmra.mxu0 %v2648
    %v2650 = vpop.f32.mrf.mxu0
    %v2651 = vadd.f32 %v2621, %v2650
    %2652 = vdwg.mxu0
    %2653 = vmatpush.msra.mxu0 0.0
    %2654 = vmatpush.msra.mxu0 0.0
    %2655 = vmatpush.msra.mxu0 0.0
    %2656 = vmatpush.msra.mxu0 0.0
    %2657 = vmatpush.msra.mxu0 0.0
    %2658 = vmatpush.msra.mxu0 0.0
    %2659 = vmatpush.msra.mxu0 0.0
    %2660 = vmatpush.msra.mxu0 0.0
    %2661 = vmatpush.msra.mxu0 0.0
    %2662 = vmatpush.msra.mxu0 0.0
    %2663 = vmatpush.msra.mxu0 0.0
    %2664 = vmatpush.msra.mxu0 0.0
    %2665 = vmatpush.msra.mxu0 0.0
    %2666 = vmatpush.msra.mxu0 0.0
    %2667 = vmatpush.msra.mxu0 0.0
    %v2668 = vand.u32 %v74, 4294901760
    %v2669 = vsub.f32 %v74, %v2668
    %v2670 = vand.u32 %v2669, 4294901760
    %2671 = vmatpush.msra.mxu0 %v2670
    %v2672 = vand.u32 %v2348, 4294901760
    %2673 = vmatmul.f32.gmra.mxu0 %v2672
    %v2674 = vpop.f32.mrf.mxu0
    %v2675 = vadd.f32 %v2645, %v2674
    %v2676 = vand.u32 %v2351, 4294901760
    %2677 = vmatmul.f32.gmra.mxu0 %v2676
    %v2678 = vpop.f32.mrf.mxu0
    %v2679 = vadd.f32 %v2651, %v2678
    %2680 = vdwg.mxu0
    %2681 = vmatpush.msra.mxu0 0.0
    %2682 = vmatpush.msra.mxu0 0.0
    %2683 = vmatpush.msra.mxu0 0.0
    %2684 = vmatpush.msra.mxu0 0.0
    %2685 = vmatpush.msra.mxu0 0.0
    %2686 = vmatpush.msra.mxu0 0.0
    %2687 = vmatpush.msra.mxu0 0.0
    %2688 = vmatpush.msra.mxu0 0.0
    %2689 = vmatpush.msra.mxu0 0.0
    %2690 = vmatpush.msra.mxu0 0.0
    %2691 = vmatpush.msra.mxu0 0.0
    %2692 = vmatpush.msra.mxu0 0.0
    %2693 = vmatpush.msra.mxu0 0.0
    %2694 = vmatpush.msra.mxu0 0.0
    %2695 = vmatpush.msra.mxu0 0.0
    %v2696 = vand.u32 %v74, 4294901760
    %2697 = vmatpush.msra.mxu0 %v2696
    %v2698 = vand.u32 %v2348, 4294901760
    %2699 = vmatmul.f32.gmra.mxu0 %v2698
    %v2700 = vpop.f32.mrf.mxu0
    %v2701 = vadd.f32 %v2675, %v2700
    %v2702 = vand.u32 %v2351, 4294901760
    %2703 = vmatmul.f32.gmra.mxu0 %v2702
    %v2704 = vpop.f32.mrf.mxu0
    %v2705 = vadd.f32 %v2679, %v2704
    %2706 = vdwg.mxu0
    %2707 = vmatpush.msra.mxu0 0.0
    %2708 = vmatpush.msra.mxu0 0.0
    %2709 = vmatpush.msra.mxu0 0.0
    %2710 = vmatpush.msra.mxu0 0.0
    %2711 = vmatpush.msra.mxu0 0.0
    %2712 = vmatpush.msra.mxu0 0.0
    %2713 = vmatpush.msra.mxu0 0.0
    %2714 = vmatpush.msra.mxu0 0.0
    %2715 = vmatpush.msra.mxu0 0.0
    %2716 = vmatpush.msra.mxu0 0.0
    %2717 = vmatpush.msra.mxu0 0.0
    %2718 = vmatpush.msra.mxu0 0.0
    %2719 = vmatpush.msra.mxu0 0.0
    %2720 = vmatpush.msra.mxu0 0.0
    %2721 = vmatpush.msra.mxu0 0.0
    %v2722 = vand.u32 %v75, 4294901760
    %2723 = vmatpush.msra.mxu0 %v2722
    %v2724 = vand.u32 %v2348, 4294901760
    %v2725 = vsub.f32 %v2348, %v2724
    %v2726 = vand.u32 %v2725, 4294901760
    %v2727 = vsub.f32 %v2725, %v2726
    %v2728 = vand.u32 %v2727, 4294901760
    %2729 = vmatmul.f32.gmra.mxu0 %v2728
    %v2730 = vpop.f32.mrf.mxu0
    %v2731 = vadd.f32 0.0, %v2730
    %v2732 = vand.u32 %v2351, 4294901760
    %v2733 = vsub.f32 %v2351, %v2732
    %v2734 = vand.u32 %v2733, 4294901760
    %v2735 = vsub.f32 %v2733, %v2734
    %v2736 = vand.u32 %v2735, 4294901760
    %2737 = vmatmul.f32.gmra.mxu0 %v2736
    %v2738 = vpop.f32.mrf.mxu0
    %v2739 = vadd.f32 0.0, %v2738
    %2740 = vdwg.mxu0
    %2741 = vmatpush.msra.mxu0 0.0
    %2742 = vmatpush.msra.mxu0 0.0
    %2743 = vmatpush.msra.mxu0 0.0
    %2744 = vmatpush.msra.mxu0 0.0
    %2745 = vmatpush.msra.mxu0 0.0
    %2746 = vmatpush.msra.mxu0 0.0
    %2747 = vmatpush.msra.mxu0 0.0
    %2748 = vmatpush.msra.mxu0 0.0
    %2749 = vmatpush.msra.mxu0 0.0
    %2750 = vmatpush.msra.mxu0 0.0
    %2751 = vmatpush.msra.mxu0 0.0
    %2752 = vmatpush.msra.mxu0 0.0
    %2753 = vmatpush.msra.mxu0 0.0
    %2754 = vmatpush.msra.mxu0 0.0
    %2755 = vmatpush.msra.mxu0 0.0
    %v2756 = vand.u32 %v75, 4294901760
    %v2757 = vsub.f32 %v75, %v2756
    %v2758 = vand.u32 %v2757, 4294901760
    %v2759 = vsub.f32 %v2757, %v2758
    %v2760 = vand.u32 %v2759, 4294901760
    %2761 = vmatpush.msra.mxu0 %v2760
    %v2762 = vand.u32 %v2348, 4294901760
    %2763 = vmatmul.f32.gmra.mxu0 %v2762
    %v2764 = vpop.f32.mrf.mxu0
    %v2765 = vadd.f32 %v2731, %v2764
    %v2766 = vand.u32 %v2351, 4294901760
    %2767 = vmatmul.f32.gmra.mxu0 %v2766
    %v2768 = vpop.f32.mrf.mxu0
    %v2769 = vadd.f32 %v2739, %v2768
    %2770 = vdwg.mxu0
    %2771 = vmatpush.msra.mxu0 0.0
    %2772 = vmatpush.msra.mxu0 0.0
    %2773 = vmatpush.msra.mxu0 0.0
    %2774 = vmatpush.msra.mxu0 0.0
    %2775 = vmatpush.msra.mxu0 0.0
    %2776 = vmatpush.msra.mxu0 0.0
    %2777 = vmatpush.msra.mxu0 0.0
    %2778 = vmatpush.msra.mxu0 0.0
    %2779 = vmatpush.msra.mxu0 0.0
    %2780 = vmatpush.msra.mxu0 0.0
    %2781 = vmatpush.msra.mxu0 0.0
    %2782 = vmatpush.msra.mxu0 0.0
    %2783 = vmatpush.msra.mxu0 0.0
    %2784 = vmatpush.msra.mxu0 0.0
    %2785 = vmatpush.msra.mxu0 0.0
    %v2786 = vand.u32 %v75, 4294901760
    %v2787 = vsub.f32 %v75, %v2786
    %2788 = vmatpush.msra.mxu0 %v2787
    %v2789 = vand.u32 %v2348, 4294901760
    %v2790 = vsub.f32 %v2348, %v2789
    %2791 = vmatmul.f32.gmra.mxu0 %v2790
    %v2792 = vpop.f32.mrf.mxu0
    %v2793 = vadd.f32 %v2765, %v2792
    %v2794 = vand.u32 %v2351, 4294901760
    %v2795 = vsub.f32 %v2351, %v2794
    %2796 = vmatmul.f32.gmra.mxu0 %v2795
    %v2797 = vpop.f32.mrf.mxu0
    %v2798 = vadd.f32 %v2769, %v2797
    %2799 = vdwg.mxu0
    %2800 = vmatpush.msra.mxu0 0.0
    %2801 = vmatpush.msra.mxu0 0.0
    %2802 = vmatpush.msra.mxu0 0.0
    %2803 = vmatpush.msra.mxu0 0.0
    %2804 = vmatpush.msra.mxu0 0.0
    %2805 = vmatpush.msra.mxu0 0.0
    %2806 = vmatpush.msra.mxu0 0.0
    %2807 = vmatpush.msra.mxu0 0.0
    %2808 = vmatpush.msra.mxu0 0.0
    %2809 = vmatpush.msra.mxu0 0.0
    %2810 = vmatpush.msra.mxu0 0.0
    %2811 = vmatpush.msra.mxu0 0.0
    %2812 = vmatpush.msra.mxu0 0.0
    %2813 = vmatpush.msra.mxu0 0.0
    %2814 = vmatpush.msra.mxu0 0.0
    %v2815 = vand.u32 %v75, 4294901760
    %2816 = vmatpush.msra.mxu0 %v2815
    %v2817 = vand.u32 %v2348, 4294901760
    %v2818 = vsub.f32 %v2348, %v2817
    %v2819 = vand.u32 %v2818, 4294901760
    %2820 = vmatmul.f32.gmra.mxu0 %v2819
    %v2821 = vpop.f32.mrf.mxu0
    %v2822 = vadd.f32 %v2793, %v2821
    %v2823 = vand.u32 %v2351, 4294901760
    %v2824 = vsub.f32 %v2351, %v2823
    %v2825 = vand.u32 %v2824, 4294901760
    %2826 = vmatmul.f32.gmra.mxu0 %v2825
    %v2827 = vpop.f32.mrf.mxu0
    %v2828 = vadd.f32 %v2798, %v2827
    %2829 = vdwg.mxu0
    %2830 = vmatpush.msra.mxu0 0.0
    %2831 = vmatpush.msra.mxu0 0.0
    %2832 = vmatpush.msra.mxu0 0.0
    %2833 = vmatpush.msra.mxu0 0.0
    %2834 = vmatpush.msra.mxu0 0.0
    %2835 = vmatpush.msra.mxu0 0.0
    %2836 = vmatpush.msra.mxu0 0.0
    %2837 = vmatpush.msra.mxu0 0.0
    %2838 = vmatpush.msra.mxu0 0.0
    %2839 = vmatpush.msra.mxu0 0.0
    %2840 = vmatpush.msra.mxu0 0.0
    %2841 = vmatpush.msra.mxu0 0.0
    %2842 = vmatpush.msra.mxu0 0.0
    %2843 = vmatpush.msra.mxu0 0.0
    %2844 = vmatpush.msra.mxu0 0.0
    %v2845 = vand.u32 %v75, 4294901760
    %v2846 = vsub.f32 %v75, %v2845
    %v2847 = vand.u32 %v2846, 4294901760
    %2848 = vmatpush.msra.mxu0 %v2847
    %v2849 = vand.u32 %v2348, 4294901760
    %2850 = vmatmul.f32.gmra.mxu0 %v2849
    %v2851 = vpop.f32.mrf.mxu0
    %v2852 = vadd.f32 %v2822, %v2851
    %v2853 = vand.u32 %v2351, 4294901760
    %2854 = vmatmul.f32.gmra.mxu0 %v2853
    %v2855 = vpop.f32.mrf.mxu0
    %v2856 = vadd.f32 %v2828, %v2855
    %2857 = vdwg.mxu0
    %2858 = vmatpush.msra.mxu0 0.0
    %2859 = vmatpush.msra.mxu0 0.0
    %2860 = vmatpush.msra.mxu0 0.0
    %2861 = vmatpush.msra.mxu0 0.0
    %2862 = vmatpush.msra.mxu0 0.0
    %2863 = vmatpush.msra.mxu0 0.0
    %2864 = vmatpush.msra.mxu0 0.0
    %2865 = vmatpush.msra.mxu0 0.0
    %2866 = vmatpush.msra.mxu0 0.0
    %2867 = vmatpush.msra.mxu0 0.0
    %2868 = vmatpush.msra.mxu0 0.0
    %2869 = vmatpush.msra.mxu0 0.0
    %2870 = vmatpush.msra.mxu0 0.0
    %2871 = vmatpush.msra.mxu0 0.0
    %2872 = vmatpush.msra.mxu0 0.0
    %v2873 = vand.u32 %v75, 4294901760
    %2874 = vmatpush.msra.mxu0 %v2873
    %v2875 = vand.u32 %v2348, 4294901760
    %2876 = vmatmul.f32.gmra.mxu0 %v2875
    %v2877 = vpop.f32.mrf.mxu0
    %v2878 = vadd.f32 %v2852, %v2877
    %v2879 = vand.u32 %v2351, 4294901760
    %2880 = vmatmul.f32.gmra.mxu0 %v2879
    %v2881 = vpop.f32.mrf.mxu0
    %v2882 = vadd.f32 %v2856, %v2881
    %2883 = vdwg.mxu0
    %v2884 = vmul.f32 %v18, %v2524
    %v2885 = vmul.f32 %v19, %v2701
    %v2886 = vmul.f32 %v20, %v2878
    %v2887 = vmul.f32 %v21, %v2528
    %v2888 = vmul.f32 %v22, %v2705
    %v2889 = vmul.f32 %v23, %v2882
    %v2891 = vperm.slane %v24, 0
    %v2892 = vperm.slane %v24, 1
    %v2893 = vperm.slane %v24, 2
    %v2897 = vmul.f32 %v2884, %v2891
    %v2898 = vmul.f32 %v2885, %v2892
    %v2899 = vmul.f32 %v2886, %v2893
    %v2900 = vmul.f32 %v2887, %v2891
    %v2901 = vmul.f32 %v2888, %v2892
    %v2902 = vmul.f32 %v2889, %v2893
    %2903 = vst [vmem:[#allocation2] sm:$0xff] %v2897
    %2904 = vst [vmem:[#allocation2 + $0x8] sm:$0xff] %v2898
    %2905 = vst [vmem:[#allocation2 + $0x10] sm:$0xff] %v2899
    %2906 = vst [vmem:[#allocation2 + $0x18] sm:$0xff] %v2900
    %2907 = vst [vmem:[#allocation2 + $0x20] sm:$0xff] %v2901
    %2908 = vst [vmem:[#allocation2 + $0x28] sm:$0xff] %v2902
    // Predicated region
    $region18: #{tpu_custom_call.1} parent=1 // pred_check
      _
    $region19: #{tpu_custom_call.1} parent=1 // pred_check_branch
      %2910 = sbr.rel (0) target = $region21
    $region20: #{tpu_custom_call.1} parent=1 // pred_region
      %2912 = vsyncadd [#allocation3], 0
      %s2913 = sshll.u32 [#allocation2], 4
      %s2914 = int_to_ptr.vmem [resolvable:$true] %s2913
      %s2915 = sshll.u32 %s4, 4
      %s2916 = int_to_ptr.hbm [resolvable:$true] %s2915
      %2921 = dma.vmem_to_hbm [thread:$0]  %s2914, 768, %s2916, [#allocation3], 384, 384, 24
    $region21: #{tpu_custom_call.1} parent=1 // pred_fallthru
      _
    // Predicated region
    $region22: #{tpu_custom_call.1} parent=1 // pred_check
      _
    $region23: #{tpu_custom_call.1} parent=1 // pred_check_branch
      %2923 = sbr.rel (0) target = $region25
    $region24: #{tpu_custom_call.1} parent=1 // pred_region
      %2925 = dma.done [#allocation3], 768
    $region25: #{tpu_custom_call.1} parent=1 // pred_fallthru
      _
    %2926 = vsyncpa [#allocation3], 1

</llo_original>
